<compile_context>
chip_gen: v7x
topology: tpu7x:2x2x1
jax: 0.10.0
libtpu: 0.0.40
codegen_flags: <defaults>
</compile_context>

<pallas_src>
import functools

import jax
import jax.numpy as jnp
from jax.experimental import pallas as pl
from jax.experimental.pallas import tpu as pltpu


# --------------------------------------------------------------------------- #
# In-kernel 3x3 conv on a (C, H*W) tile (pixels on the lane axis).            #
# Uses a zero-padded staging buffer + one K=9C MXU matmul.                    #
# --------------------------------------------------------------------------- #
def _conv3x3_stacked(x_bf16, xpad_scr, stack_scr, w_slab_ref, mleft, mright,
                     *, W):
    """3x3 conv (padding=1) of one image held as (C, H*W) bf16.

    x_bf16     : (C, HW) bf16 activation (channels on sublanes, pixels on lanes)
    xpad_scr   : (C, HW + 2W + 2) bf16 VMEM scratch; halo columns already zero.
    stack_scr  : (9C, HW) bf16 VMEM scratch for the stacked matmul operand.
    w_slab_ref : (Cout, 9C) bf16 weight slab, K ordered (ky, kx, cin).
    mleft/mright : (1, HW) bf16 column masks for the dx=-1 / dx=+1 taps.
    Returns (Cout, HW) float32.
    """
    C, HW = x_bf16.shape
    P = W + 1
    # write the image into the middle of the padded buffer
    xpad_scr[:, P:P + HW] = x_bf16
    # stage the 9 shifted taps; vertical halo comes from the zero padding,
    # only horizontal +-1 taps need a column mask (row-wrap pixels).
    for ky in range(3):
        for kx in range(3):
            k = ky * 3 + kx
            start = ky * W + kx            # == (ky-1)*W + (kx-1) + (W+1)
            part = xpad_scr[:, start:start + HW]
            if kx == 0:
                part = part * mleft
            elif kx == 2:
                part = part * mright
            stack_scr[k * C:(k + 1) * C, :] = part
    # single MXU matmul with K = 9*C
    return jnp.dot(w_slab_ref[...], stack_scr[...],
                   preferred_element_type=jnp.float32)


# ------------------------------ fused kernel -------------------------------- #
def _suphead_kernel(x_ref, wsc_ref, sc_s_ref, sc_b_ref,
                    w1_ref, bn1_s_ref, bn1_b_ref,
                    w2_ref, bn2_s_ref, bn2_b_ref,
                    wseg_ref, bseg_ref, wcls_ref, bcls_ref, mask_ref,
                    xout_ref, seg_ref, cls_ref,
                    res_scr, xpad_scr, stack_scr, *, W):
    Cout, HW = xout_ref.shape
    P = W + 1

    # Zero the halo columns of the padded staging buffer.  Done every grid
    # step (cheap: 2 * Cout * (W+1) bf16) so it stays correct if the parallel
    # batch axis is sharded across TensorCores.
    zpad = jnp.zeros((Cout, P), jnp.bfloat16)
    xpad_scr[:, :P] = zpad
    xpad_scr[:, P + HW:] = zpad

    mleft = mask_ref[0:1, :]
    mright = mask_ref[1:2, :]

    # ---- shortcut: 1x1 conv + folded BN (residual branch) ------------------
    res = jnp.dot(wsc_ref[...], x_ref[...], preferred_element_type=jnp.float32)
    res = res * sc_s_ref[...] + sc_b_ref[...]
    res_scr[...] = res

    # ---- conv1 3x3 + folded BN1 + ReLU --------------------------------------
    acc1 = _conv3x3_stacked(res.astype(jnp.bfloat16), xpad_scr, stack_scr,
                            w1_ref, mleft, mright, W=W)
    y1 = jnp.maximum(acc1 * bn1_s_ref[...] + bn1_b_ref[...], 0.0)

    # ---- conv2 3x3 + folded BN2 -> residual add -> ReLU ----------------------
    acc2 = _conv3x3_stacked(y1.astype(jnp.bfloat16), xpad_scr, stack_scr,
                            w2_ref, mleft, mright, W=W)
    y2 = acc2 * bn2_s_ref[...] + bn2_b_ref[...]
    xo = jnp.maximum(res_scr[...] + y2, 0.0)
    xout_ref[...] = xo

    # ---- segmentation head: 1x1 conv (lane-dense (classes, HW) output) -----
    xb = xo.astype(jnp.bfloat16)
    seg_ref[...] = (jnp.dot(wseg_ref[...], xb,
                            preferred_element_type=jnp.float32)
                    + bseg_ref[...])

    # ---- classification head: GAP first, tiny matvec, softmax --------------
    gap = jnp.sum(xo, axis=1, keepdims=True) * (1.0 / HW)       # (Cout, 1) f32
    logits = (jnp.dot(wcls_ref[...], gap, preferred_element_type=jnp.float32)
              + bcls_ref[...])                                   # (classes, 1)
    m = jnp.max(logits, axis=0, keepdims=True)
    e = jnp.exp(logits - m)
    denom = jnp.sum(e, axis=0, keepdims=True)
    cls_ref[...] = e * pl.reciprocal(denom, approx=True)


# ------------------------------ wrapper glue -------------------------------- #
def _col_masks(H, W):
    """(2, H*W) bf16 masks: row 0 valid where x>=1 (dx=-1), row 1 where x<=W-2."""
    xx = jnp.tile(jnp.arange(W), H)
    left = xx >= 1
    right = xx <= W - 2
    return jnp.stack([left, right]).astype(jnp.bfloat16)


def _conv_slab(w_hwio):
    # (3, 3, C, Cout) -> (Cout, 9*C); K index = (ky*3 + kx)*C + cin, matching
    # the tap order staged into the (9C, HW) scratch.
    kh, kw, c, cout = w_hwio.shape
    return (jnp.transpose(w_hwio, (3, 0, 1, 2))
            .reshape(cout, kh * kw * c).astype(jnp.bfloat16))


def _vmem_limit_bytes():
    # ~75% of the physical VMEM of the current generation, capped at 100 MiB
    # (v5e/v6e: 96 MiB; v7x: 48 MiB).
    try:
        cap = pltpu.get_tpu_info().vmem_capacity_bytes
    except Exception:
        cap = 64 * 1024 * 1024
    return min(int(cap) * 3 // 4, 100 * 1024 * 1024)


@jax.jit
def sup_head_forward(x_nchw, p):
    B, Cin, H, W = x_nchw.shape
    HW = H * W
    Cout = p["w_sc"].shape[1]
    classes = p["w_seg"].shape[1]

    # NCHW -> (B, C, H*W): free reshape, and ship as bf16 (MXU operand only).
    x3 = x_nchw.reshape(B, Cin, HW).astype(jnp.bfloat16)

    col = lambda v: v.reshape(-1, 1).astype(jnp.float32)
    wsc_t = p["w_sc"].T.astype(jnp.bfloat16)            # (Cout, Cin)
    w1_slab = _conv_slab(p["w1"])                        # (Cout, 9*Cout)
    w2_slab = _conv_slab(p["w2"])
    wseg_t = p["w_seg"].T.astype(jnp.bfloat16)          # (classes, Cout)
    wcls_t = p["w_cls"].T.astype(jnp.float32)           # tiny matvec: keep f32
    masks = _col_masks(H, W)                             # (2, HW) bf16

    cparams = pltpu.CompilerParams(
        dimension_semantics=("parallel",),
        vmem_limit_bytes=_vmem_limit_bytes())

    def full(shape):
        n = len(shape)
        return pl.BlockSpec(shape, lambda b, _n=n: (0,) * _n)

    def img(c, n):
        return pl.BlockSpec((None, c, n), lambda b: (b, 0, 0))

    x_out3, seg3, cls3 = pl.pallas_call(
        functools.partial(_suphead_kernel, W=W),
        grid=(B,),
        in_specs=[img(Cin, HW),
                  full((Cout, Cin)), full((Cout, 1)), full((Cout, 1)),
                  full((Cout, 9 * Cout)), full((Cout, 1)), full((Cout, 1)),
                  full((Cout, 9 * Cout)), full((Cout, 1)), full((Cout, 1)),
                  full((classes, Cout)), full((classes, 1)),
                  full((classes, Cout)), full((classes, 1)),
                  full((2, HW))],
        out_specs=(img(Cout, HW),
                   img(classes, HW),
                   pl.BlockSpec((None, classes, 1), lambda b: (b, 0, 0))),
        out_shape=(jax.ShapeDtypeStruct((B, Cout, HW), jnp.float32),
                   jax.ShapeDtypeStruct((B, classes, HW), jnp.float32),
                   jax.ShapeDtypeStruct((B, classes, 1), jnp.float32)),
        scratch_shapes=[pltpu.VMEM((Cout, HW), jnp.float32),        # res
                        pltpu.VMEM((Cout, HW + 2 * W + 2), jnp.bfloat16),
                        pltpu.VMEM((9 * Cout, HW), jnp.bfloat16)],  # K=9C stack
        compiler_params=cparams,
    )(x3, wsc_t, col(p["sc_scale"]), col(p["sc_bias"]),
      w1_slab, col(p["bn1_scale"]), col(p["bn1_bias"]),
      w2_slab, col(p["bn2_scale"]), col(p["bn2_bias"]),
      wseg_t, col(p["b_seg"]), wcls_t, col(p["b_cls"]), masks)

    x_out = x_out3.reshape(B, Cout, H, W)
    seg_pred = seg3.reshape(B, classes, H, W)
    class_pred = cls3.reshape(B, classes, 1, 1)
    return x_out, seg_pred, class_pred


# ------------------------- pure-JAX f32 reference --------------------------- #
def _ref_forward(x, p):
    dn = ("NCHW", "HWIO", "NCHW")
    conv = lambda v, w, pad: jax.lax.conv_general_dilated(
        v, w, (1, 1), pad, dimension_numbers=dn)
    bc = lambda v: v[None, :, None, None]
    res = (conv(x, p["w_sc"][None, None], "VALID") * bc(p["sc_scale"])
           + bc(p["sc_bias"]))
    y1 = jnp.maximum(
        conv(res, p["w1"], "SAME") * bc(p["bn1_scale"]) + bc(p["bn1_bias"]), 0.0)
    y2 = conv(y1, p["w2"], "SAME") * bc(p["bn2_scale"]) + bc(p["bn2_bias"])
    xo = jnp.maximum(res + y2, 0.0)
    seg = conv(xo, p["w_seg"][None, None], "VALID") + bc(p["b_seg"])
    pool = jnp.mean(xo, axis=(2, 3))
    cls = jax.nn.softmax(pool @ p["w_cls"] + p["b_cls"], axis=-1)
    return xo, seg, cls.reshape(cls.shape[0], -1, 1, 1)


# ------------------------ deterministic parameters -------------------------- #
def make_params(key, in_features, out_features, classes, eps=1e-5):
    ks = jax.random.split(key, 19)

    def bn_fold(kg, kb, km, kv, c):
        gamma = 1.0 + 0.1 * jax.random.normal(kg, (c,), jnp.float32)
        beta = 0.1 * jax.random.normal(kb, (c,), jnp.float32)
        mean = 0.1 * jax.random.normal(km, (c,), jnp.float32)
        var = jax.random.uniform(kv, (c,), jnp.float32, 0.5, 1.5)
        scale = gamma / jnp.sqrt(var + eps)
        return scale, beta - mean * scale

    sc_scale, sc_bias = bn_fold(ks[0], ks[1], ks[2], ks[3], out_features)
    bn1_scale, bn1_bias = bn_fold(ks[4], ks[5], ks[6], ks[7], out_features)
    bn2_scale, bn2_bias = bn_fold(ks[8], ks[9], ks[10], ks[11], out_features)

    return {
        "w_sc": 0.1 * jax.random.normal(ks[12], (in_features, out_features),
                                        jnp.float32),
        "sc_scale": sc_scale, "sc_bias": sc_bias,
        "w1": 0.05 * jax.random.normal(ks[13],
                                       (3, 3, out_features, out_features),
                                       jnp.float32),
        "bn1_scale": bn1_scale, "bn1_bias": bn1_bias,
        "w2": 0.05 * jax.random.normal(ks[14],
                                       (3, 3, out_features, out_features),
                                       jnp.float32),
        "bn2_scale": bn2_scale, "bn2_bias": bn2_bias,
        "w_seg": 0.1 * jax.random.normal(ks[15], (out_features, classes),
                                         jnp.float32),
        "b_seg": 0.05 * jax.random.normal(ks[16], (classes,), jnp.float32),
        "w_cls": 0.1 * jax.random.normal(ks[17], (out_features, classes),
                                         jnp.float32),
        "b_cls": 0.05 * jax.random.normal(ks[18], (classes,), jnp.float32),
    }


if __name__ == "__main__":
    # Small shapes: batch=2, in_features=4, H=W=16, out_features=32, classes=16
    B, Cin, H, W = 2, 4, 16, 16
    Cout, classes = 32, 16

    key = jax.random.PRNGKey(0)
    kx, kp = jax.random.split(key)
    x = jax.random.normal(kx, (B, Cin, H, W), jnp.float32)   # NCHW like PyTorch
    params = make_params(kp, Cin, Cout, classes)

    x_out, seg_pred, class_pred = jax.block_until_ready(
        sup_head_forward(x, params))

    # sanity-check against a pure-JAX f32 reference
    rx, rseg, rcls = jax.block_until_ready(_ref_forward(x, params))
    assert x_out.shape == (B, Cout, H, W)
    assert seg_pred.shape == (B, classes, H, W)
    assert class_pred.shape == (B, classes, 1, 1)
    # bf16 MXU operands (f32 accumulation) -> looser tolerance than pure f32
    assert jnp.allclose(x_out, rx, atol=5e-2, rtol=5e-2)
    assert jnp.allclose(seg_pred, rseg, atol=5e-2, rtol=5e-2)
    assert jnp.allclose(class_pred, rcls, atol=2e-2, rtol=2e-2)

    print("KERNEL_OK")
</pallas_src>

<mosaic_0001>
module attributes {stable_mosaic.version = 11 : i64} {
  func.func @_suphead_kernel(%arg0: i32, %arg1: memref<1x4x256xbf16, #tpu.memory_space<vmem>>, %arg2: memref<32x4xbf16, #tpu.memory_space<vmem>>, %arg3: memref<32x1xf32, #tpu.memory_space<vmem>>, %arg4: memref<32x1xf32, #tpu.memory_space<vmem>>, %arg5: memref<32x288xbf16, #tpu.memory_space<vmem>>, %arg6: memref<32x1xf32, #tpu.memory_space<vmem>>, %arg7: memref<32x1xf32, #tpu.memory_space<vmem>>, %arg8: memref<32x288xbf16, #tpu.memory_space<vmem>>, %arg9: memref<32x1xf32, #tpu.memory_space<vmem>>, %arg10: memref<32x1xf32, #tpu.memory_space<vmem>>, %arg11: memref<16x32xbf16, #tpu.memory_space<vmem>>, %arg12: memref<16x1xf32, #tpu.memory_space<vmem>>, %arg13: memref<16x32xf32, #tpu.memory_space<vmem>>, %arg14: memref<16x1xf32, #tpu.memory_space<vmem>>, %arg15: memref<2x256xbf16, #tpu.memory_space<vmem>>, %arg16: memref<1x32x256xf32, #tpu.memory_space<vmem>>, %arg17: memref<1x16x256xf32, #tpu.memory_space<vmem>>, %arg18: memref<1x16x1xf32, #tpu.memory_space<vmem>>, %arg19: memref<32x256xf32, #tpu.memory_space<vmem>>, %arg20: memref<32x290xbf16, #tpu.memory_space<vmem>>, %arg21: memref<288x256xbf16, #tpu.memory_space<vmem>>) attributes {dimension_semantics = [#tpu.dimension_semantics<parallel>], iteration_bounds = array<i64: 2>, scalar_prefetch = 0 : i64, scratch_operands = 3 : i64, tpu.core_type = #tpu.core_type<tc>, window_params = [{transform_indices = @transform_0, window_bounds = array<i64: 1, 4, 256>}, {pipeline_mode = #tpu.pipeline_mode<synchronous>, transform_indices = @transform_1, window_bounds = array<i64: 32, 4>}, {pipeline_mode = #tpu.pipeline_mode<synchronous>, transform_indices = @transform_2, window_bounds = array<i64: 32, 1>}, {pipeline_mode = #tpu.pipeline_mode<synchronous>, transform_indices = @transform_3, window_bounds = array<i64: 32, 1>}, {pipeline_mode = #tpu.pipeline_mode<synchronous>, transform_indices = @transform_4, window_bounds = array<i64: 32, 288>}, {pipeline_mode = #tpu.pipeline_mode<synchronous>, transform_indices = @transform_5, window_bounds = array<i64: 32, 1>}, {pipeline_mode = #tpu.pipeline_mode<synchronous>, transform_indices = @transform_6, window_bounds = array<i64: 32, 1>}, {pipeline_mode = #tpu.pipeline_mode<synchronous>, transform_indices = @transform_7, window_bounds = array<i64: 32, 288>}, {pipeline_mode = #tpu.pipeline_mode<synchronous>, transform_indices = @transform_8, window_bounds = array<i64: 32, 1>}, {pipeline_mode = #tpu.pipeline_mode<synchronous>, transform_indices = @transform_9, window_bounds = array<i64: 32, 1>}, {pipeline_mode = #tpu.pipeline_mode<synchronous>, transform_indices = @transform_10, window_bounds = array<i64: 16, 32>}, {pipeline_mode = #tpu.pipeline_mode<synchronous>, transform_indices = @transform_11, window_bounds = array<i64: 16, 1>}, {pipeline_mode = #tpu.pipeline_mode<synchronous>, transform_indices = @transform_12, window_bounds = array<i64: 16, 32>}, {pipeline_mode = #tpu.pipeline_mode<synchronous>, transform_indices = @transform_13, window_bounds = array<i64: 16, 1>}, {pipeline_mode = #tpu.pipeline_mode<synchronous>, transform_indices = @transform_14, window_bounds = array<i64: 2, 256>}, {transform_indices = @transform_15, window_bounds = array<i64: 1, 32, 256>}, {transform_indices = @transform_16, window_bounds = array<i64: 1, 16, 256>}, {transform_indices = @transform_17, window_bounds = array<i64: 1, 16, 1>}]} {
    %cst = arith.constant 0.000000e+00 : bf16
    %0 = vector.broadcast %cst : bf16 to vector<32x17xbf16>
    %c0 = arith.constant 0 : index
    %c0_0 = arith.constant 0 : index
    %1 = vector.load %arg20[%c0, %c0_0] : memref<32x290xbf16, #tpu.memory_space<vmem>>, vector<32x17xbf16>
    tpu.vector_store %arg20[%c0, %c0_0], %0 {strides = array<i32>} : memref<32x290xbf16, #tpu.memory_space<vmem>>, vector<32x17xbf16>,
    %c0_1 = arith.constant 0 : index
    %c273 = arith.constant 273 : index
    %2 = vector.load %arg20[%c0_1, %c273] : memref<32x290xbf16, #tpu.memory_space<vmem>>, vector<32x17xbf16>
    tpu.vector_store %arg20[%c0_1, %c273], %0 {strides = array<i32>} : memref<32x290xbf16, #tpu.memory_space<vmem>>, vector<32x17xbf16>,
    %c0_2 = arith.constant 0 : index
    %c0_3 = arith.constant 0 : index
    %3 = vector.load %arg15[%c0_2, %c0_3] : memref<2x256xbf16, #tpu.memory_space<vmem>>, vector<1x256xbf16>
    %c1 = arith.constant 1 : index
    %c0_4 = arith.constant 0 : index
    %4 = vector.load %arg15[%c1, %c0_4] : memref<2x256xbf16, #tpu.memory_space<vmem>>, vector<1x256xbf16>
    %c0_5 = arith.constant 0 : index
    %c0_6 = arith.constant 0 : index
    %5 = vector.load %arg2[%c0_5, %c0_6] : memref<32x4xbf16, #tpu.memory_space<vmem>>, vector<32x4xbf16>
    %c0_7 = arith.constant 0 : index
    %c0_8 = arith.constant 0 : index
    %c0_9 = arith.constant 0 : index
    %6 = vector.load %arg1[%c0_7, %c0_8, %c0_9] : memref<1x4x256xbf16, #tpu.memory_space<vmem>>, vector<1x4x256xbf16>
    %7 = vector.shape_cast %6 : vector<1x4x256xbf16> to vector<4x256xbf16>
    %cst_10 = arith.constant dense<0.000000e+00> : vector<32x256xf32>
    %8 = tpu.matmul %5, %7, %cst_10 {dimension_numbers = #tpu.dot_dimension_numbers<[1], [0], [0], [1], [0, 0, 1, 1], [], []>} : vector<32x4xbf16>, vector<4x256xbf16>, vector<32x256xf32> -> vector<32x256xf32>
    %c0_11 = arith.constant 0 : index
    %c0_12 = arith.constant 0 : index
    %9 = vector.load %arg3[%c0_11, %c0_12] : memref<32x1xf32, #tpu.memory_space<vmem>>, vector<32x1xf32>
    %10 = vector.broadcast %9 : vector<32x1xf32> to vector<32x256xf32>
    %11 = arith.mulf %8, %10 : vector<32x256xf32>
    %c0_13 = arith.constant 0 : index
    %c0_14 = arith.constant 0 : index
    %12 = vector.load %arg4[%c0_13, %c0_14] : memref<32x1xf32, #tpu.memory_space<vmem>>, vector<32x1xf32>
    %13 = vector.broadcast %12 : vector<32x1xf32> to vector<32x256xf32>
    %14 = arith.addf %11, %13 : vector<32x256xf32>
    %c0_15 = arith.constant 0 : index
    %c0_16 = arith.constant 0 : index
    %15 = vector.load %arg19[%c0_15, %c0_16] : memref<32x256xf32, #tpu.memory_space<vmem>>, vector<32x256xf32>
    tpu.vector_store %arg19[%c0_15, %c0_16], %14 {strides = array<i32>} : memref<32x256xf32, #tpu.memory_space<vmem>>, vector<32x256xf32>,
    %16 = arith.truncf %14 : vector<32x256xf32> to vector<32x256xbf16>
    %c0_17 = arith.constant 0 : index
    %c17 = arith.constant 17 : index
    %17 = vector.load %arg20[%c0_17, %c17] : memref<32x290xbf16, #tpu.memory_space<vmem>>, vector<32x256xbf16>
    tpu.vector_store %arg20[%c0_17, %c17], %16 {strides = array<i32>} : memref<32x290xbf16, #tpu.memory_space<vmem>>, vector<32x256xbf16>,
    %c0_18 = arith.constant 0 : index
    %c0_19 = arith.constant 0 : index
    %18 = vector.load %arg20[%c0_18, %c0_19] : memref<32x290xbf16, #tpu.memory_space<vmem>>, vector<32x256xbf16>
    %19 = vector.broadcast %3 : vector<1x256xbf16> to vector<32x256xbf16>
    %20 = arith.mulf %18, %19 : vector<32x256xbf16>
    %c0_20 = arith.constant 0 : index
    %c0_21 = arith.constant 0 : index
    %21 = vector.load %arg21[%c0_20, %c0_21] : memref<288x256xbf16, #tpu.memory_space<vmem>>, vector<32x256xbf16>
    tpu.vector_store %arg21[%c0_20, %c0_21], %20 {strides = array<i32>} : memref<288x256xbf16, #tpu.memory_space<vmem>>, vector<32x256xbf16>,
    %c0_22 = arith.constant 0 : index
    %c1_23 = arith.constant 1 : index
    %22 = vector.load %arg20[%c0_22, %c1_23] : memref<32x290xbf16, #tpu.memory_space<vmem>>, vector<32x256xbf16>
    %c32 = arith.constant 32 : index
    %c0_24 = arith.constant 0 : index
    %23 = vector.load %arg21[%c32, %c0_24] : memref<288x256xbf16, #tpu.memory_space<vmem>>, vector<32x256xbf16>
    tpu.vector_store %arg21[%c32, %c0_24], %22 {strides = array<i32>} : memref<288x256xbf16, #tpu.memory_space<vmem>>, vector<32x256xbf16>,
    %c0_25 = arith.constant 0 : index
    %c2 = arith.constant 2 : index
    %24 = vector.load %arg20[%c0_25, %c2] : memref<32x290xbf16, #tpu.memory_space<vmem>>, vector<32x256xbf16>
    %25 = vector.broadcast %4 : vector<1x256xbf16> to vector<32x256xbf16>
    %26 = arith.mulf %24, %25 : vector<32x256xbf16>
    %c64 = arith.constant 64 : index
    %c0_26 = arith.constant 0 : index
    %27 = vector.load %arg21[%c64, %c0_26] : memref<288x256xbf16, #tpu.memory_space<vmem>>, vector<32x256xbf16>
    tpu.vector_store %arg21[%c64, %c0_26], %26 {strides = array<i32>} : memref<288x256xbf16, #tpu.memory_space<vmem>>, vector<32x256xbf16>,
    %c0_27 = arith.constant 0 : index
    %c16 = arith.constant 16 : index
    %28 = vector.load %arg20[%c0_27, %c16] : memref<32x290xbf16, #tpu.memory_space<vmem>>, vector<32x256xbf16>
    %29 = vector.broadcast %3 : vector<1x256xbf16> to vector<32x256xbf16>
    %30 = arith.mulf %28, %29 : vector<32x256xbf16>
    %c96 = arith.constant 96 : index
    %c0_28 = arith.constant 0 : index
    %31 = vector.load %arg21[%c96, %c0_28] : memref<288x256xbf16, #tpu.memory_space<vmem>>, vector<32x256xbf16>
    tpu.vector_store %arg21[%c96, %c0_28], %30 {strides = array<i32>} : memref<288x256xbf16, #tpu.memory_space<vmem>>, vector<32x256xbf16>,
    %c0_29 = arith.constant 0 : index
    %c17_30 = arith.constant 17 : index
    %32 = vector.load %arg20[%c0_29, %c17_30] : memref<32x290xbf16, #tpu.memory_space<vmem>>, vector<32x256xbf16>
    %c128 = arith.constant 128 : index
    %c0_31 = arith.constant 0 : index
    %33 = vector.load %arg21[%c128, %c0_31] : memref<288x256xbf16, #tpu.memory_space<vmem>>, vector<32x256xbf16>
    tpu.vector_store %arg21[%c128, %c0_31], %32 {strides = array<i32>} : memref<288x256xbf16, #tpu.memory_space<vmem>>, vector<32x256xbf16>,
    %c0_32 = arith.constant 0 : index
    %c18 = arith.constant 18 : index
    %34 = vector.load %arg20[%c0_32, %c18] : memref<32x290xbf16, #tpu.memory_space<vmem>>, vector<32x256xbf16>
    %35 = vector.broadcast %4 : vector<1x256xbf16> to vector<32x256xbf16>
    %36 = arith.mulf %34, %35 : vector<32x256xbf16>
    %c160 = arith.constant 160 : index
    %c0_33 = arith.constant 0 : index
    %37 = vector.load %arg21[%c160, %c0_33] : memref<288x256xbf16, #tpu.memory_space<vmem>>, vector<32x256xbf16>
    tpu.vector_store %arg21[%c160, %c0_33], %36 {strides = array<i32>} : memref<288x256xbf16, #tpu.memory_space<vmem>>, vector<32x256xbf16>,
    %c0_34 = arith.constant 0 : index
    %c32_35 = arith.constant 32 : index
    %38 = vector.load %arg20[%c0_34, %c32_35] : memref<32x290xbf16, #tpu.memory_space<vmem>>, vector<32x256xbf16>
    %39 = vector.broadcast %3 : vector<1x256xbf16> to vector<32x256xbf16>
    %40 = arith.mulf %38, %39 : vector<32x256xbf16>
    %c192 = arith.constant 192 : index
    %c0_36 = arith.constant 0 : index
    %41 = vector.load %arg21[%c192, %c0_36] : memref<288x256xbf16, #tpu.memory_space<vmem>>, vector<32x256xbf16>
    tpu.vector_store %arg21[%c192, %c0_36], %40 {strides = array<i32>} : memref<288x256xbf16, #tpu.memory_space<vmem>>, vector<32x256xbf16>,
    %c0_37 = arith.constant 0 : index
    %c33 = arith.constant 33 : index
    %42 = vector.load %arg20[%c0_37, %c33] : memref<32x290xbf16, #tpu.memory_space<vmem>>, vector<32x256xbf16>
    %c224 = arith.constant 224 : index
    %c0_38 = arith.constant 0 : index
    %43 = vector.load %arg21[%c224, %c0_38] : memref<288x256xbf16, #tpu.memory_space<vmem>>, vector<32x256xbf16>
    tpu.vector_store %arg21[%c224, %c0_38], %42 {strides = array<i32>} : memref<288x256xbf16, #tpu.memory_space<vmem>>, vector<32x256xbf16>,
    %c0_39 = arith.constant 0 : index
    %c34 = arith.constant 34 : index
    %44 = vector.load %arg20[%c0_39, %c34] : memref<32x290xbf16, #tpu.memory_space<vmem>>, vector<32x256xbf16>
    %45 = vector.broadcast %4 : vector<1x256xbf16> to vector<32x256xbf16>
    %46 = arith.mulf %44, %45 : vector<32x256xbf16>
    %c256 = arith.constant 256 : index
    %c0_40 = arith.constant 0 : index
    %47 = vector.load %arg21[%c256, %c0_40] : memref<288x256xbf16, #tpu.memory_space<vmem>>, vector<32x256xbf16>
    tpu.vector_store %arg21[%c256, %c0_40], %46 {strides = array<i32>} : memref<288x256xbf16, #tpu.memory_space<vmem>>, vector<32x256xbf16>,
    %c0_41 = arith.constant 0 : index
    %c0_42 = arith.constant 0 : index
    %48 = vector.load %arg5[%c0_41, %c0_42] : memref<32x288xbf16, #tpu.memory_space<vmem>>, vector<32x288xbf16>
    %c0_43 = arith.constant 0 : index
    %c0_44 = arith.constant 0 : index
    %49 = vector.load %arg21[%c0_43, %c0_44] : memref<288x256xbf16, #tpu.memory_space<vmem>>, vector<288x256xbf16>
    %cst_45 = arith.constant dense<0.000000e+00> : vector<32x256xf32>
    %50 = tpu.matmul %48, %49, %cst_45 {dimension_numbers = #tpu.dot_dimension_numbers<[1], [0], [0], [1], [0, 0, 1, 1], [], []>} : vector<32x288xbf16>, vector<288x256xbf16>, vector<32x256xf32> -> vector<32x256xf32>
    %c0_46 = arith.constant 0 : index
    %c0_47 = arith.constant 0 : index
    %51 = vector.load %arg6[%c0_46, %c0_47] : memref<32x1xf32, #tpu.memory_space<vmem>>, vector<32x1xf32>
    %52 = vector.broadcast %51 : vector<32x1xf32> to vector<32x256xf32>
    %53 = arith.mulf %50, %52 : vector<32x256xf32>
    %c0_48 = arith.constant 0 : index
    %c0_49 = arith.constant 0 : index
    %54 = vector.load %arg7[%c0_48, %c0_49] : memref<32x1xf32, #tpu.memory_space<vmem>>, vector<32x1xf32>
    %55 = vector.broadcast %54 : vector<32x1xf32> to vector<32x256xf32>
    %56 = arith.addf %53, %55 : vector<32x256xf32>
    %cst_50 = arith.constant 0.000000e+00 : f32
    %57 = vector.broadcast %cst_50 : f32 to vector<32x256xf32>
    %58 = arith.maximumf %56, %57 : vector<32x256xf32>
    %59 = arith.truncf %58 : vector<32x256xf32> to vector<32x256xbf16>
    %c0_51 = arith.constant 0 : index
    %c17_52 = arith.constant 17 : index
    %60 = vector.load %arg20[%c0_51, %c17_52] : memref<32x290xbf16, #tpu.memory_space<vmem>>, vector<32x256xbf16>
    tpu.vector_store %arg20[%c0_51, %c17_52], %59 {strides = array<i32>} : memref<32x290xbf16, #tpu.memory_space<vmem>>, vector<32x256xbf16>,
    %c0_53 = arith.constant 0 : index
    %c0_54 = arith.constant 0 : index
    %61 = vector.load %arg20[%c0_53, %c0_54] : memref<32x290xbf16, #tpu.memory_space<vmem>>, vector<32x256xbf16>
    %62 = vector.broadcast %3 : vector<1x256xbf16> to vector<32x256xbf16>
    %63 = arith.mulf %61, %62 : vector<32x256xbf16>
    %c0_55 = arith.constant 0 : index
    %c0_56 = arith.constant 0 : index
    %64 = vector.load %arg21[%c0_55, %c0_56] : memref<288x256xbf16, #tpu.memory_space<vmem>>, vector<32x256xbf16>
    tpu.vector_store %arg21[%c0_55, %c0_56], %63 {strides = array<i32>} : memref<288x256xbf16, #tpu.memory_space<vmem>>, vector<32x256xbf16>,
    %c0_57 = arith.constant 0 : index
    %c1_58 = arith.constant 1 : index
    %65 = vector.load %arg20[%c0_57, %c1_58] : memref<32x290xbf16, #tpu.memory_space<vmem>>, vector<32x256xbf16>
    %c32_59 = arith.constant 32 : index
    %c0_60 = arith.constant 0 : index
    %66 = vector.load %arg21[%c32_59, %c0_60] : memref<288x256xbf16, #tpu.memory_space<vmem>>, vector<32x256xbf16>
    tpu.vector_store %arg21[%c32_59, %c0_60], %65 {strides = array<i32>} : memref<288x256xbf16, #tpu.memory_space<vmem>>, vector<32x256xbf16>,
    %c0_61 = arith.constant 0 : index
    %c2_62 = arith.constant 2 : index
    %67 = vector.load %arg20[%c0_61, %c2_62] : memref<32x290xbf16, #tpu.memory_space<vmem>>, vector<32x256xbf16>
    %68 = vector.broadcast %4 : vector<1x256xbf16> to vector<32x256xbf16>
    %69 = arith.mulf %67, %68 : vector<32x256xbf16>
    %c64_63 = arith.constant 64 : index
    %c0_64 = arith.constant 0 : index
    %70 = vector.load %arg21[%c64_63, %c0_64] : memref<288x256xbf16, #tpu.memory_space<vmem>>, vector<32x256xbf16>
    tpu.vector_store %arg21[%c64_63, %c0_64], %69 {strides = array<i32>} : memref<288x256xbf16, #tpu.memory_space<vmem>>, vector<32x256xbf16>,
    %c0_65 = arith.constant 0 : index
    %c16_66 = arith.constant 16 : index
    %71 = vector.load %arg20[%c0_65, %c16_66] : memref<32x290xbf16, #tpu.memory_space<vmem>>, vector<32x256xbf16>
    %72 = vector.broadcast %3 : vector<1x256xbf16> to vector<32x256xbf16>
    %73 = arith.mulf %71, %72 : vector<32x256xbf16>
    %c96_67 = arith.constant 96 : index
    %c0_68 = arith.constant 0 : index
    %74 = vector.load %arg21[%c96_67, %c0_68] : memref<288x256xbf16, #tpu.memory_space<vmem>>, vector<32x256xbf16>
    tpu.vector_store %arg21[%c96_67, %c0_68], %73 {strides = array<i32>} : memref<288x256xbf16, #tpu.memory_space<vmem>>, vector<32x256xbf16>,
    %c0_69 = arith.constant 0 : index
    %c17_70 = arith.constant 17 : index
    %75 = vector.load %arg20[%c0_69, %c17_70] : memref<32x290xbf16, #tpu.memory_space<vmem>>, vector<32x256xbf16>
    %c128_71 = arith.constant 128 : index
    %c0_72 = arith.constant 0 : index
    %76 = vector.load %arg21[%c128_71, %c0_72] : memref<288x256xbf16, #tpu.memory_space<vmem>>, vector<32x256xbf16>
    tpu.vector_store %arg21[%c128_71, %c0_72], %75 {strides = array<i32>} : memref<288x256xbf16, #tpu.memory_space<vmem>>, vector<32x256xbf16>,
    %c0_73 = arith.constant 0 : index
    %c18_74 = arith.constant 18 : index
    %77 = vector.load %arg20[%c0_73, %c18_74] : memref<32x290xbf16, #tpu.memory_space<vmem>>, vector<32x256xbf16>
    %78 = vector.broadcast %4 : vector<1x256xbf16> to vector<32x256xbf16>
    %79 = arith.mulf %77, %78 : vector<32x256xbf16>
    %c160_75 = arith.constant 160 : index
    %c0_76 = arith.constant 0 : index
    %80 = vector.load %arg21[%c160_75, %c0_76] : memref<288x256xbf16, #tpu.memory_space<vmem>>, vector<32x256xbf16>
    tpu.vector_store %arg21[%c160_75, %c0_76], %79 {strides = array<i32>} : memref<288x256xbf16, #tpu.memory_space<vmem>>, vector<32x256xbf16>,
    %c0_77 = arith.constant 0 : index
    %c32_78 = arith.constant 32 : index
    %81 = vector.load %arg20[%c0_77, %c32_78] : memref<32x290xbf16, #tpu.memory_space<vmem>>, vector<32x256xbf16>
    %82 = vector.broadcast %3 : vector<1x256xbf16> to vector<32x256xbf16>
    %83 = arith.mulf %81, %82 : vector<32x256xbf16>
    %c192_79 = arith.constant 192 : index
    %c0_80 = arith.constant 0 : index
    %84 = vector.load %arg21[%c192_79, %c0_80] : memref<288x256xbf16, #tpu.memory_space<vmem>>, vector<32x256xbf16>
    tpu.vector_store %arg21[%c192_79, %c0_80], %83 {strides = array<i32>} : memref<288x256xbf16, #tpu.memory_space<vmem>>, vector<32x256xbf16>,
    %c0_81 = arith.constant 0 : index
    %c33_82 = arith.constant 33 : index
    %85 = vector.load %arg20[%c0_81, %c33_82] : memref<32x290xbf16, #tpu.memory_space<vmem>>, vector<32x256xbf16>
    %c224_83 = arith.constant 224 : index
    %c0_84 = arith.constant 0 : index
    %86 = vector.load %arg21[%c224_83, %c0_84] : memref<288x256xbf16, #tpu.memory_space<vmem>>, vector<32x256xbf16>
    tpu.vector_store %arg21[%c224_83, %c0_84], %85 {strides = array<i32>} : memref<288x256xbf16, #tpu.memory_space<vmem>>, vector<32x256xbf16>,
    %c0_85 = arith.constant 0 : index
    %c34_86 = arith.constant 34 : index
    %87 = vector.load %arg20[%c0_85, %c34_86] : memref<32x290xbf16, #tpu.memory_space<vmem>>, vector<32x256xbf16>
    %88 = vector.broadcast %4 : vector<1x256xbf16> to vector<32x256xbf16>
    %89 = arith.mulf %87, %88 : vector<32x256xbf16>
    %c256_87 = arith.constant 256 : index
    %c0_88 = arith.constant 0 : index
    %90 = vector.load %arg21[%c256_87, %c0_88] : memref<288x256xbf16, #tpu.memory_space<vmem>>, vector<32x256xbf16>
    tpu.vector_store %arg21[%c256_87, %c0_88], %89 {strides = array<i32>} : memref<288x256xbf16, #tpu.memory_space<vmem>>, vector<32x256xbf16>,
    %c0_89 = arith.constant 0 : index
    %c0_90 = arith.constant 0 : index
    %91 = vector.load %arg8[%c0_89, %c0_90] : memref<32x288xbf16, #tpu.memory_space<vmem>>, vector<32x288xbf16>
    %c0_91 = arith.constant 0 : index
    %c0_92 = arith.constant 0 : index
    %92 = vector.load %arg21[%c0_91, %c0_92] : memref<288x256xbf16, #tpu.memory_space<vmem>>, vector<288x256xbf16>
    %cst_93 = arith.constant dense<0.000000e+00> : vector<32x256xf32>
    %93 = tpu.matmul %91, %92, %cst_93 {dimension_numbers = #tpu.dot_dimension_numbers<[1], [0], [0], [1], [0, 0, 1, 1], [], []>} : vector<32x288xbf16>, vector<288x256xbf16>, vector<32x256xf32> -> vector<32x256xf32>
    %c0_94 = arith.constant 0 : index
    %c0_95 = arith.constant 0 : index
    %94 = vector.load %arg9[%c0_94, %c0_95] : memref<32x1xf32, #tpu.memory_space<vmem>>, vector<32x1xf32>
    %95 = vector.broadcast %94 : vector<32x1xf32> to vector<32x256xf32>
    %96 = arith.mulf %93, %95 : vector<32x256xf32>
    %c0_96 = arith.constant 0 : index
    %c0_97 = arith.constant 0 : index
    %97 = vector.load %arg10[%c0_96, %c0_97] : memref<32x1xf32, #tpu.memory_space<vmem>>, vector<32x1xf32>
    %98 = vector.broadcast %97 : vector<32x1xf32> to vector<32x256xf32>
    %99 = arith.addf %96, %98 : vector<32x256xf32>
    %c0_98 = arith.constant 0 : index
    %c0_99 = arith.constant 0 : index
    %100 = vector.load %arg19[%c0_98, %c0_99] : memref<32x256xf32, #tpu.memory_space<vmem>>, vector<32x256xf32>
    %101 = arith.addf %100, %99 : vector<32x256xf32>
    %cst_100 = arith.constant 0.000000e+00 : f32
    %102 = vector.broadcast %cst_100 : f32 to vector<32x256xf32>
    %103 = arith.maximumf %101, %102 : vector<32x256xf32>
    %c0_101 = arith.constant 0 : index
    %c0_102 = arith.constant 0 : index
    %c0_103 = arith.constant 0 : index
    %104 = vector.load %arg16[%c0_101, %c0_102, %c0_103] : memref<1x32x256xf32, #tpu.memory_space<vmem>>, vector<1x32x256xf32>
    %105 = vector.shape_cast %104 : vector<1x32x256xf32> to vector<32x256xf32>
    %106 = vector.shape_cast %103 : vector<32x256xf32> to vector<1x32x256xf32>
    tpu.vector_store %arg16[%c0_101, %c0_102, %c0_103], %106 {strides = array<i32>} : memref<1x32x256xf32, #tpu.memory_space<vmem>>, vector<1x32x256xf32>,
    %107 = arith.truncf %103 : vector<32x256xf32> to vector<32x256xbf16>
    %c0_104 = arith.constant 0 : index
    %c0_105 = arith.constant 0 : index
    %108 = vector.load %arg11[%c0_104, %c0_105] : memref<16x32xbf16, #tpu.memory_space<vmem>>, vector<16x32xbf16>
    %cst_106 = arith.constant dense<0.000000e+00> : vector<16x256xf32>
    %109 = tpu.matmul %108, %107, %cst_106 {dimension_numbers = #tpu.dot_dimension_numbers<[1], [0], [0], [1], [0, 0, 1, 1], [], []>} : vector<16x32xbf16>, vector<32x256xbf16>, vector<16x256xf32> -> vector<16x256xf32>
    %c0_107 = arith.constant 0 : index
    %c0_108 = arith.constant 0 : index
    %110 = vector.load %arg12[%c0_107, %c0_108] : memref<16x1xf32, #tpu.memory_space<vmem>>, vector<16x1xf32>
    %111 = vector.broadcast %110 : vector<16x1xf32> to vector<16x256xf32>
    %112 = arith.addf %109, %111 : vector<16x256xf32>
    %c0_109 = arith.constant 0 : index
    %c0_110 = arith.constant 0 : index
    %c0_111 = arith.constant 0 : index
    %113 = vector.load %arg17[%c0_109, %c0_110, %c0_111] : memref<1x16x256xf32, #tpu.memory_space<vmem>>, vector<1x16x256xf32>
    %114 = vector.shape_cast %113 : vector<1x16x256xf32> to vector<16x256xf32>
    %115 = vector.shape_cast %112 : vector<16x256xf32> to vector<1x16x256xf32>
    tpu.vector_store %arg17[%c0_109, %c0_110, %c0_111], %115 {strides = array<i32>} : memref<1x16x256xf32, #tpu.memory_space<vmem>>, vector<1x16x256xf32>,
    %cst_112 = arith.constant dense<0.000000e+00> : vector<32xf32>
    %116 = vector.multi_reduction <add>, %103, %cst_112 [1] : vector<32x256xf32> to vector<32xf32>
    %117 = vector.shape_cast %116 : vector<32xf32> to vector<32x1xf32>
    %cst_113 = arith.constant 3.906250e-03 : f32
    %118 = vector.broadcast %cst_113 : f32 to vector<32x1xf32>
    %119 = arith.mulf %117, %118 : vector<32x1xf32>
    %c0_114 = arith.constant 0 : index
    %c0_115 = arith.constant 0 : index
    %120 = vector.load %arg13[%c0_114, %c0_115] : memref<16x32xf32, #tpu.memory_space<vmem>>, vector<16x32xf32>
    %cst_116 = arith.constant dense<0.000000e+00> : vector<16x1xf32>
    %121 = tpu.matmul %120, %119, %cst_116 {dimension_numbers = #tpu.dot_dimension_numbers<[1], [0], [0], [1], [0, 0, 1, 1], [], []>} : vector<16x32xf32>, vector<32x1xf32>, vector<16x1xf32> -> vector<16x1xf32>
    %c0_117 = arith.constant 0 : index
    %c0_118 = arith.constant 0 : index
    %122 = vector.load %arg14[%c0_117, %c0_118] : memref<16x1xf32, #tpu.memory_space<vmem>>, vector<16x1xf32>
    %123 = arith.addf %121, %122 : vector<16x1xf32>
    %cst_119 = arith.constant dense<0xFF800000> : vector<1xf32>
    %124 = vector.multi_reduction <maximumf>, %123, %cst_119 [0] : vector<16x1xf32> to vector<1xf32>
    %125 = vector.shape_cast %124 : vector<1xf32> to vector<1x1xf32>
    %126 = vector.broadcast %125 : vector<1x1xf32> to vector<16x1xf32>
    %127 = arith.subf %123, %126 : vector<16x1xf32>
    %128 = math.exp %127 : vector<16x1xf32>
    %cst_120 = arith.constant dense<0.000000e+00> : vector<1xf32>
    %129 = vector.multi_reduction <add>, %128, %cst_120 [0] : vector<16x1xf32> to vector<1xf32>
    %130 = vector.shape_cast %129 : vector<1xf32> to vector<1x1xf32>
    %131 = tpu.reciprocal %130 {approx = true} : vector<1x1xf32> -> vector<1x1xf32>
    %132 = vector.broadcast %131 : vector<1x1xf32> to vector<16x1xf32>
    %133 = arith.mulf %128, %132 : vector<16x1xf32>
    %c0_121 = arith.constant 0 : index
    %c0_122 = arith.constant 0 : index
    %c0_123 = arith.constant 0 : index
    %134 = vector.load %arg18[%c0_121, %c0_122, %c0_123] : memref<1x16x1xf32, #tpu.memory_space<vmem>>, vector<1x16x1xf32>
    %135 = vector.shape_cast %134 : vector<1x16x1xf32> to vector<16x1xf32>
    %136 = vector.shape_cast %133 : vector<16x1xf32> to vector<1x16x1xf32>
    tpu.vector_store %arg18[%c0_121, %c0_122, %c0_123], %136 {strides = array<i32>} : memref<1x16x1xf32, #tpu.memory_space<vmem>>, vector<1x16x1xf32>,
    return
  }
  func.func @transform_0(%arg0: i32) -> (i32, i32, i32) {
    %c0_i32 = arith.constant 0 : i32
    %c0_i32_0 = arith.constant 0 : i32
    %c0_i32_1 = arith.constant 0 : i32
    return %arg0, %c0_i32, %c0_i32_0 : i32, i32, i32
  }
  func.func @transform_1(%arg0: i32) -> (i32, i32) {
    %c0_i32 = arith.constant 0 : i32
    %c0_i32_0 = arith.constant 0 : i32
    %c0_i32_1 = arith.constant 0 : i32
    return %c0_i32, %c0_i32_0 : i32, i32
  }
  func.func @transform_2(%arg0: i32) -> (i32, i32) {
    %c0_i32 = arith.constant 0 : i32
    %c0_i32_0 = arith.constant 0 : i32
    %c0_i32_1 = arith.constant 0 : i32
    return %c0_i32, %c0_i32_0 : i32, i32
  }
  func.func @transform_3(%arg0: i32) -> (i32, i32) {
    %c0_i32 = arith.constant 0 : i32
    %c0_i32_0 = arith.constant 0 : i32
    %c0_i32_1 = arith.constant 0 : i32
    return %c0_i32, %c0_i32_0 : i32, i32
  }
  func.func @transform_4(%arg0: i32) -> (i32, i32) {
    %c0_i32 = arith.constant 0 : i32
    %c0_i32_0 = arith.constant 0 : i32
    %c0_i32_1 = arith.constant 0 : i32
    return %c0_i32, %c0_i32_0 : i32, i32
  }
  func.func @transform_5(%arg0: i32) -> (i32, i32) {
    %c0_i32 = arith.constant 0 : i32
    %c0_i32_0 = arith.constant 0 : i32
    %c0_i32_1 = arith.constant 0 : i32
    return %c0_i32, %c0_i32_0 : i32, i32
  }
  func.func @transform_6(%arg0: i32) -> (i32, i32) {
    %c0_i32 = arith.constant 0 : i32
    %c0_i32_0 = arith.constant 0 : i32
    %c0_i32_1 = arith.constant 0 : i32
    return %c0_i32, %c0_i32_0 : i32, i32
  }
  func.func @transform_7(%arg0: i32) -> (i32, i32) {
    %c0_i32 = arith.constant 0 : i32
    %c0_i32_0 = arith.constant 0 : i32
    %c0_i32_1 = arith.constant 0 : i32
    return %c0_i32, %c0_i32_0 : i32, i32
  }
  func.func @transform_8(%arg0: i32) -> (i32, i32) {
    %c0_i32 = arith.constant 0 : i32
    %c0_i32_0 = arith.constant 0 : i32
    %c0_i32_1 = arith.constant 0 : i32
    return %c0_i32, %c0_i32_0 : i32, i32
  }
  func.func @transform_9(%arg0: i32) -> (i32, i32) {
    %c0_i32 = arith.constant 0 : i32
    %c0_i32_0 = arith.constant 0 : i32
    %c0_i32_1 = arith.constant 0 : i32
    return %c0_i32, %c0_i32_0 : i32, i32
  }
  func.func @transform_10(%arg0: i32) -> (i32, i32) {
    %c0_i32 = arith.constant 0 : i32
    %c0_i32_0 = arith.constant 0 : i32
    %c0_i32_1 = arith.constant 0 : i32
    return %c0_i32, %c0_i32_0 : i32, i32
  }
  func.func @transform_11(%arg0: i32) -> (i32, i32) {
    %c0_i32 = arith.constant 0 : i32
    %c0_i32_0 = arith.constant 0 : i32
    %c0_i32_1 = arith.constant 0 : i32
    return %c0_i32, %c0_i32_0 : i32, i32
  }
  func.func @transform_12(%arg0: i32) -> (i32, i32) {
    %c0_i32 = arith.constant 0 : i32
    %c0_i32_0 = arith.constant 0 : i32
    %c0_i32_1 = arith.constant 0 : i32
    return %c0_i32, %c0_i32_0 : i32, i32
  }
  func.func @transform_13(%arg0: i32) -> (i32, i32) {
    %c0_i32 = arith.constant 0 : i32
    %c0_i32_0 = arith.constant 0 : i32
    %c0_i32_1 = arith.constant 0 : i32
    return %c0_i32, %c0_i32_0 : i32, i32
  }
  func.func @transform_14(%arg0: i32) -> (i32, i32) {
    %c0_i32 = arith.constant 0 : i32
    %c0_i32_0 = arith.constant 0 : i32
    %c0_i32_1 = arith.constant 0 : i32
    return %c0_i32, %c0_i32_0 : i32, i32
  }
  func.func @transform_15(%arg0: i32) -> (i32, i32, i32) {
    %c0_i32 = arith.constant 0 : i32
    %c0_i32_0 = arith.constant 0 : i32
    %c0_i32_1 = arith.constant 0 : i32
    return %arg0, %c0_i32, %c0_i32_0 : i32, i32, i32
  }
  func.func @transform_16(%arg0: i32) -> (i32, i32, i32) {
    %c0_i32 = arith.constant 0 : i32
    %c0_i32_0 = arith.constant 0 : i32
    %c0_i32_1 = arith.constant 0 : i32
    return %arg0, %c0_i32, %c0_i32_0 : i32, i32, i32
  }
  func.func @transform_17(%arg0: i32) -> (i32, i32, i32) {
    %c0_i32 = arith.constant 0 : i32
    %c0_i32_0 = arith.constant 0 : i32
    %c0_i32_1 = arith.constant 0 : i32
    return %arg0, %c0_i32, %c0_i32_0 : i32, i32, i32
  }
}

</mosaic_0001>

<llo_original>
// kernel: sup_head_forward.1
$region0: #{sup_head_forward.1}
  #allocation0 [shape = 'u32[]', space=smem, size = 0x4, offset = 0x4, fixed_abs, tag = 'smem constant byte address 0x4 - core index']
  #allocation1 [shape = 'u32[144,128]{1,0:T(1,128)}', space=vmem, size = 0x12000, scoped, tag = 'internal scratch']
  #allocation2 [shape = 'f32[32,256]{1,0:T(8,128)}', space=vmem, size = 0x8000, scoped, tag = 'scratch operand']
  #allocation3 [shape = 'bf16[32,290]{1,0:T(16,128)(2,1)}', space=vmem, size = 0x6000, scoped, tag = 'scratch operand']
  #allocation4 [shape = 'bf16[288,256]{1,0:T(16,128)(2,1)}', space=vmem, size = 0x24000, scoped, tag = 'scratch operand']
  %s0 = inlined_call_operand.vmem [shape: bf16[2,4,256], index: 0, kind: input, shape index: {}]
  %s1 = inlined_call_operand.vmem [shape: bf16[32,4], index: 1, kind: input, shape index: {}]
  %s2 = inlined_call_operand.vmem [shape: f32[32,1], index: 2, kind: input, shape index: {}]
  %s3 = inlined_call_operand.vmem [shape: f32[32,1], index: 3, kind: input, shape index: {}]
  %s4 = inlined_call_operand.vmem [shape: bf16[32,288], index: 4, kind: input, shape index: {}]
  %s5 = inlined_call_operand.vmem [shape: f32[32,1], index: 5, kind: input, shape index: {}]
  %s6 = inlined_call_operand.vmem [shape: f32[32,1], index: 6, kind: input, shape index: {}]
  %s7 = inlined_call_operand.vmem [shape: bf16[32,288], index: 7, kind: input, shape index: {}]
  %s8 = inlined_call_operand.vmem [shape: f32[32,1], index: 8, kind: input, shape index: {}]
  %s9 = inlined_call_operand.vmem [shape: f32[32,1], index: 9, kind: input, shape index: {}]
  %s10 = inlined_call_operand.vmem [shape: bf16[16,32], index: 10, kind: input, shape index: {}]
  %s11 = inlined_call_operand.vmem [shape: f32[16,1], index: 11, kind: input, shape index: {}]
  %s12 = inlined_call_operand.vmem [shape: f32[16,32], index: 12, kind: input, shape index: {}]
  %s13 = inlined_call_operand.vmem [shape: f32[16,1], index: 13, kind: input, shape index: {}]
  %s14 = inlined_call_operand.vmem [shape: bf16[2,256], index: 14, kind: input, shape index: {}]
  %s15 = inlined_call_operand.vmem [shape: f32[2,32,256], index: 15, kind: output, shape index: {0}]
  %s16 = inlined_call_operand.vmem [shape: f32[2,16,256], index: 16, kind: output, shape index: {1}]
  %s17 = inlined_call_operand.vmem [shape: f32[2,16,1], index: 17, kind: output, shape index: {2}]
  %18 = xla_tuple %s15, %s16, %s17
  %s19 = sld [smem:[#allocation0]]
  $region109: #{sup_head_forward.1} parent=0
    _
  %s21 = ssub.s32 1, %s19
  %s22 = scalar_select 0, %s21, %s19
  loop: start=0, step=1, limit=4
  $region2: #{sup_head_forward.1} parent=0 // loop_pre_header
    _
  $region3: #{sup_head_forward.1} parent=0 // loop_header
    %s24 = sphi 0, %s28
    %p25 = scmp.ge.s32.totalorder %s24, 4
    %s34 = sphi 0, %s36
    %s37 = sphi 0, %s34
    %s38 = sphi 0, %s37
    %s54 = sphi 0, %s38
    %s58 = sphi 0, %s58
    %s60 = sphi 0, %s58
    %s61 = sphi 0, %s60
    %s75 = sphi 0, %s61
    %s79 = sphi 0, %s79
    %s81 = sphi 0, %s79
    %s82 = sphi 0, %s81
    %s96 = sphi 0, %s82
    %s100 = sphi 0, %s100
    %s102 = sphi 0, %s100
    %s103 = sphi 0, %s102
    %s117 = sphi 0, %s103
    %s121 = sphi 0, %s121
    %s123 = sphi 0, %s121
    %s124 = sphi 0, %s123
    %s138 = sphi 0, %s124
    %s142 = sphi 0, %s142
    %s144 = sphi 0, %s142
    %s145 = sphi 0, %s144
    %s159 = sphi 0, %s145
    %s163 = sphi 0, %s163
    %s165 = sphi 0, %s163
    %s166 = sphi 0, %s165
    %s180 = sphi 0, %s166
    %s184 = sphi 0, %s184
    %s186 = sphi 0, %s184
    %s187 = sphi 0, %s186
    %s201 = sphi 0, %s187
    %s205 = sphi 0, %s205
    %s207 = sphi 0, %s205
    %s208 = sphi 0, %s207
    %s222 = sphi 0, %s208
    %s226 = sphi 0, %s226
    %s228 = sphi 0, %s226
    %s229 = sphi 0, %s228
    %s243 = sphi 0, %s229
    %s247 = sphi 0, %s247
    %s249 = sphi 0, %s247
    %s250 = sphi 0, %s249
    %s264 = sphi 0, %s250
    %s268 = sphi 0, %s268
    %s270 = sphi 0, %s268
    %s271 = sphi 0, %s270
    %s285 = sphi 0, %s271
    %s289 = sphi 0, %s289
    %s291 = sphi 0, %s289
    %s292 = sphi 0, %s291
    %s306 = sphi 0, %s292
    %s310 = sphi 0, %s310
    %s312 = sphi 0, %s310
    %s313 = sphi 0, %s312
    %s327 = sphi 0, %s313
    %s331 = sphi 0, %s331
    %s333 = sphi 0, %s331
    %s334 = sphi 0, %s333
    %s348 = sphi 0, %s334
    %s354 = sphi 0, %s356
    %s357 = sphi 0, %s354
    %s358 = sphi 0, %s357
    %s374 = sphi 0, %s358
    %s380 = sphi 0, %s382
    %s383 = sphi 0, %s380
    %s384 = sphi 0, %s383
    %s400 = sphi 0, %s384
    %s406 = sphi 0, %s408
    %s409 = sphi 0, %s406
    %s410 = sphi 0, %s409
    %s426 = sphi 0, %s410
  $region4: #{sup_head_forward.1} parent=0 // loop_header_branch
    %27 = sbr.rel (%p25) target = $region8
  $region5: #{sup_head_forward.1} parent=0 // loop_body
    %s29 = ssub.s32 %s24, 1
    %s30 = ssub.s32 %s24, 2
    %s31 = sadd.s32 %s24, 1
    %s32 = ssub.s32 %s24, %s31
    %p33 = scmp.eq.s32.totalorder %s32, 0
    %s35 = sadd.s32 %s34, 1
    %s36 = scalar_select %p33, %s34, %s35
    %p39 = pneg %p33
    %p40 = scmp.eq.s32.totalorder %s24, 1
    %p41 = por %p39, %p40
    %p42 = scmp.ne.s32.totalorder %s34, %s37
    %p43 = scmp.eq.s32.totalorder %s24, 0
    %p44 = por %p42, %p43
    %p45 = scmp.ne.s32.totalorder %s34, %s37
    %p46 = scmp.eq.s32.totalorder %s29, 1
    %p47 = por %p45, %p46
    %p48 = scmp.ne.s32.totalorder %s37, %s38
    %p49 = scmp.eq.s32.totalorder %s29, 0
    %p50 = por %p48, %p49
    %p51 = scmp.ne.s32.totalorder %s37, %s38
    %p52 = scmp.eq.s32.totalorder %s30, 1
    %p53 = por %p51, %p52
    %p55 = scmp.ne.s32.totalorder %s38, %s54
    %p56 = scmp.eq.s32.totalorder %s30, 0
    %p57 = por %p55, %p56
    %s59 = sadd.s32 %s58, 1
    %p62 = scmp.eq.s32.totalorder %s24, 1
    %p63 = scmp.ne.s32.totalorder %s58, %s60
    %p64 = scmp.eq.s32.totalorder %s24, 0
    %p65 = por %p63, %p64
    %p66 = scmp.ne.s32.totalorder %s58, %s60
    %p67 = scmp.eq.s32.totalorder %s29, 1
    %p68 = por %p66, %p67
    %p69 = scmp.ne.s32.totalorder %s60, %s61
    %p70 = scmp.eq.s32.totalorder %s29, 0
    %p71 = por %p69, %p70
    %p72 = scmp.ne.s32.totalorder %s60, %s61
    %p73 = scmp.eq.s32.totalorder %s30, 1
    %p74 = por %p72, %p73
    %p76 = scmp.ne.s32.totalorder %s61, %s75
    %p77 = scmp.eq.s32.totalorder %s30, 0
    %p78 = por %p76, %p77
    %s80 = sadd.s32 %s79, 1
    %p83 = scmp.eq.s32.totalorder %s24, 1
    %p84 = scmp.ne.s32.totalorder %s79, %s81
    %p85 = scmp.eq.s32.totalorder %s24, 0
    %p86 = por %p84, %p85
    %p87 = scmp.ne.s32.totalorder %s79, %s81
    %p88 = scmp.eq.s32.totalorder %s29, 1
    %p89 = por %p87, %p88
    %p90 = scmp.ne.s32.totalorder %s81, %s82
    %p91 = scmp.eq.s32.totalorder %s29, 0
    %p92 = por %p90, %p91
    %p93 = scmp.ne.s32.totalorder %s81, %s82
    %p94 = scmp.eq.s32.totalorder %s30, 1
    %p95 = por %p93, %p94
    %p97 = scmp.ne.s32.totalorder %s82, %s96
    %p98 = scmp.eq.s32.totalorder %s30, 0
    %p99 = por %p97, %p98
    %s101 = sadd.s32 %s100, 1
    %p104 = scmp.eq.s32.totalorder %s24, 1
    %p105 = scmp.ne.s32.totalorder %s100, %s102
    %p106 = scmp.eq.s32.totalorder %s24, 0
    %p107 = por %p105, %p106
    %p108 = scmp.ne.s32.totalorder %s100, %s102
    %p109 = scmp.eq.s32.totalorder %s29, 1
    %p110 = por %p108, %p109
    %p111 = scmp.ne.s32.totalorder %s102, %s103
    %p112 = scmp.eq.s32.totalorder %s29, 0
    %p113 = por %p111, %p112
    %p114 = scmp.ne.s32.totalorder %s102, %s103
    %p115 = scmp.eq.s32.totalorder %s30, 1
    %p116 = por %p114, %p115
    %p118 = scmp.ne.s32.totalorder %s103, %s117
    %p119 = scmp.eq.s32.totalorder %s30, 0
    %p120 = por %p118, %p119
    %s122 = sadd.s32 %s121, 1
    %p125 = scmp.eq.s32.totalorder %s24, 1
    %p126 = scmp.ne.s32.totalorder %s121, %s123
    %p127 = scmp.eq.s32.totalorder %s24, 0
    %p128 = por %p126, %p127
    %p129 = scmp.ne.s32.totalorder %s121, %s123
    %p130 = scmp.eq.s32.totalorder %s29, 1
    %p131 = por %p129, %p130
    %p132 = scmp.ne.s32.totalorder %s123, %s124
    %p133 = scmp.eq.s32.totalorder %s29, 0
    %p134 = por %p132, %p133
    %p135 = scmp.ne.s32.totalorder %s123, %s124
    %p136 = scmp.eq.s32.totalorder %s30, 1
    %p137 = por %p135, %p136
    %p139 = scmp.ne.s32.totalorder %s124, %s138
    %p140 = scmp.eq.s32.totalorder %s30, 0
    %p141 = por %p139, %p140
    %s143 = sadd.s32 %s142, 1
    %p146 = scmp.eq.s32.totalorder %s24, 1
    %p147 = scmp.ne.s32.totalorder %s142, %s144
    %p148 = scmp.eq.s32.totalorder %s24, 0
    %p149 = por %p147, %p148
    %p150 = scmp.ne.s32.totalorder %s142, %s144
    %p151 = scmp.eq.s32.totalorder %s29, 1
    %p152 = por %p150, %p151
    %p153 = scmp.ne.s32.totalorder %s144, %s145
    %p154 = scmp.eq.s32.totalorder %s29, 0
    %p155 = por %p153, %p154
    %p156 = scmp.ne.s32.totalorder %s144, %s145
    %p157 = scmp.eq.s32.totalorder %s30, 1
    %p158 = por %p156, %p157
    %p160 = scmp.ne.s32.totalorder %s145, %s159
    %p161 = scmp.eq.s32.totalorder %s30, 0
    %p162 = por %p160, %p161
    %s164 = sadd.s32 %s163, 1
    %p167 = scmp.eq.s32.totalorder %s24, 1
    %p168 = scmp.ne.s32.totalorder %s163, %s165
    %p169 = scmp.eq.s32.totalorder %s24, 0
    %p170 = por %p168, %p169
    %p171 = scmp.ne.s32.totalorder %s163, %s165
    %p172 = scmp.eq.s32.totalorder %s29, 1
    %p173 = por %p171, %p172
    %p174 = scmp.ne.s32.totalorder %s165, %s166
    %p175 = scmp.eq.s32.totalorder %s29, 0
    %p176 = por %p174, %p175
    %p177 = scmp.ne.s32.totalorder %s165, %s166
    %p178 = scmp.eq.s32.totalorder %s30, 1
    %p179 = por %p177, %p178
    %p181 = scmp.ne.s32.totalorder %s166, %s180
    %p182 = scmp.eq.s32.totalorder %s30, 0
    %p183 = por %p181, %p182
    %s185 = sadd.s32 %s184, 1
    %p188 = scmp.eq.s32.totalorder %s24, 1
    %p189 = scmp.ne.s32.totalorder %s184, %s186
    %p190 = scmp.eq.s32.totalorder %s24, 0
    %p191 = por %p189, %p190
    %p192 = scmp.ne.s32.totalorder %s184, %s186
    %p193 = scmp.eq.s32.totalorder %s29, 1
    %p194 = por %p192, %p193
    %p195 = scmp.ne.s32.totalorder %s186, %s187
    %p196 = scmp.eq.s32.totalorder %s29, 0
    %p197 = por %p195, %p196
    %p198 = scmp.ne.s32.totalorder %s186, %s187
    %p199 = scmp.eq.s32.totalorder %s30, 1
    %p200 = por %p198, %p199
    %p202 = scmp.ne.s32.totalorder %s187, %s201
    %p203 = scmp.eq.s32.totalorder %s30, 0
    %p204 = por %p202, %p203
    %s206 = sadd.s32 %s205, 1
    %p209 = scmp.eq.s32.totalorder %s24, 1
    %p210 = scmp.ne.s32.totalorder %s205, %s207
    %p211 = scmp.eq.s32.totalorder %s24, 0
    %p212 = por %p210, %p211
    %p213 = scmp.ne.s32.totalorder %s205, %s207
    %p214 = scmp.eq.s32.totalorder %s29, 1
    %p215 = por %p213, %p214
    %p216 = scmp.ne.s32.totalorder %s207, %s208
    %p217 = scmp.eq.s32.totalorder %s29, 0
    %p218 = por %p216, %p217
    %p219 = scmp.ne.s32.totalorder %s207, %s208
    %p220 = scmp.eq.s32.totalorder %s30, 1
    %p221 = por %p219, %p220
    %p223 = scmp.ne.s32.totalorder %s208, %s222
    %p224 = scmp.eq.s32.totalorder %s30, 0
    %p225 = por %p223, %p224
    %s227 = sadd.s32 %s226, 1
    %p230 = scmp.eq.s32.totalorder %s24, 1
    %p231 = scmp.ne.s32.totalorder %s226, %s228
    %p232 = scmp.eq.s32.totalorder %s24, 0
    %p233 = por %p231, %p232
    %p234 = scmp.ne.s32.totalorder %s226, %s228
    %p235 = scmp.eq.s32.totalorder %s29, 1
    %p236 = por %p234, %p235
    %p237 = scmp.ne.s32.totalorder %s228, %s229
    %p238 = scmp.eq.s32.totalorder %s29, 0
    %p239 = por %p237, %p238
    %p240 = scmp.ne.s32.totalorder %s228, %s229
    %p241 = scmp.eq.s32.totalorder %s30, 1
    %p242 = por %p240, %p241
    %p244 = scmp.ne.s32.totalorder %s229, %s243
    %p245 = scmp.eq.s32.totalorder %s30, 0
    %p246 = por %p244, %p245
    %s248 = sadd.s32 %s247, 1
    %p251 = scmp.eq.s32.totalorder %s24, 1
    %p252 = scmp.ne.s32.totalorder %s247, %s249
    %p253 = scmp.eq.s32.totalorder %s24, 0
    %p254 = por %p252, %p253
    %p255 = scmp.ne.s32.totalorder %s247, %s249
    %p256 = scmp.eq.s32.totalorder %s29, 1
    %p257 = por %p255, %p256
    %p258 = scmp.ne.s32.totalorder %s249, %s250
    %p259 = scmp.eq.s32.totalorder %s29, 0
    %p260 = por %p258, %p259
    %p261 = scmp.ne.s32.totalorder %s249, %s250
    %p262 = scmp.eq.s32.totalorder %s30, 1
    %p263 = por %p261, %p262
    %p265 = scmp.ne.s32.totalorder %s250, %s264
    %p266 = scmp.eq.s32.totalorder %s30, 0
    %p267 = por %p265, %p266
    %s269 = sadd.s32 %s268, 1
    %p272 = scmp.eq.s32.totalorder %s24, 1
    %p273 = scmp.ne.s32.totalorder %s268, %s270
    %p274 = scmp.eq.s32.totalorder %s24, 0
    %p275 = por %p273, %p274
    %p276 = scmp.ne.s32.totalorder %s268, %s270
    %p277 = scmp.eq.s32.totalorder %s29, 1
    %p278 = por %p276, %p277
    %p279 = scmp.ne.s32.totalorder %s270, %s271
    %p280 = scmp.eq.s32.totalorder %s29, 0
    %p281 = por %p279, %p280
    %p282 = scmp.ne.s32.totalorder %s270, %s271
    %p283 = scmp.eq.s32.totalorder %s30, 1
    %p284 = por %p282, %p283
    %p286 = scmp.ne.s32.totalorder %s271, %s285
    %p287 = scmp.eq.s32.totalorder %s30, 0
    %p288 = por %p286, %p287
    %s290 = sadd.s32 %s289, 1
    %p293 = scmp.eq.s32.totalorder %s24, 1
    %p294 = scmp.ne.s32.totalorder %s289, %s291
    %p295 = scmp.eq.s32.totalorder %s24, 0
    %p296 = por %p294, %p295
    %p297 = scmp.ne.s32.totalorder %s289, %s291
    %p298 = scmp.eq.s32.totalorder %s29, 1
    %p299 = por %p297, %p298
    %p300 = scmp.ne.s32.totalorder %s291, %s292
    %p301 = scmp.eq.s32.totalorder %s29, 0
    %p302 = por %p300, %p301
    %p303 = scmp.ne.s32.totalorder %s291, %s292
    %p304 = scmp.eq.s32.totalorder %s30, 1
    %p305 = por %p303, %p304
    %p307 = scmp.ne.s32.totalorder %s292, %s306
    %p308 = scmp.eq.s32.totalorder %s30, 0
    %p309 = por %p307, %p308
    %s311 = sadd.s32 %s310, 1
    %p314 = scmp.eq.s32.totalorder %s24, 1
    %p315 = scmp.ne.s32.totalorder %s310, %s312
    %p316 = scmp.eq.s32.totalorder %s24, 0
    %p317 = por %p315, %p316
    %p318 = scmp.ne.s32.totalorder %s310, %s312
    %p319 = scmp.eq.s32.totalorder %s29, 1
    %p320 = por %p318, %p319
    %p321 = scmp.ne.s32.totalorder %s312, %s313
    %p322 = scmp.eq.s32.totalorder %s29, 0
    %p323 = por %p321, %p322
    %p324 = scmp.ne.s32.totalorder %s312, %s313
    %p325 = scmp.eq.s32.totalorder %s30, 1
    %p326 = por %p324, %p325
    %p328 = scmp.ne.s32.totalorder %s313, %s327
    %p329 = scmp.eq.s32.totalorder %s30, 0
    %p330 = por %p328, %p329
    %s332 = sadd.s32 %s331, 1
    %p335 = scmp.eq.s32.totalorder %s24, 1
    %p336 = scmp.ne.s32.totalorder %s331, %s333
    %p337 = scmp.eq.s32.totalorder %s24, 0
    %p338 = por %p336, %p337
    %p339 = scmp.ne.s32.totalorder %s331, %s333
    %p340 = scmp.eq.s32.totalorder %s29, 1
    %p341 = por %p339, %p340
    %p342 = scmp.ne.s32.totalorder %s333, %s334
    %p343 = scmp.eq.s32.totalorder %s29, 0
    %p344 = por %p342, %p343
    %p345 = scmp.ne.s32.totalorder %s333, %s334
    %p346 = scmp.eq.s32.totalorder %s30, 1
    %p347 = por %p345, %p346
    %p349 = scmp.ne.s32.totalorder %s334, %s348
    %p350 = scmp.eq.s32.totalorder %s30, 0
    %p351 = por %p349, %p350
    %s352 = ssub.s32 %s24, %s31
    %p353 = scmp.eq.s32.totalorder %s352, 0
    %s355 = sadd.s32 %s354, 1
    %s356 = scalar_select %p353, %s354, %s355
    %p359 = pneg %p353
    %p360 = scmp.eq.s32.totalorder %s24, 1
    %p361 = por %p359, %p360
    %p362 = scmp.ne.s32.totalorder %s354, %s357
    %p363 = scmp.eq.s32.totalorder %s24, 0
    %p364 = por %p362, %p363
    %p365 = scmp.ne.s32.totalorder %s354, %s357
    %p366 = scmp.eq.s32.totalorder %s29, 1
    %p367 = por %p365, %p366
    %p368 = scmp.ne.s32.totalorder %s357, %s358
    %p369 = scmp.eq.s32.totalorder %s29, 0
    %p370 = por %p368, %p369
    %p371 = scmp.ne.s32.totalorder %s357, %s358
    %p372 = scmp.eq.s32.totalorder %s30, 1
    %p373 = por %p371, %p372
    %p375 = scmp.ne.s32.totalorder %s358, %s374
    %p376 = scmp.eq.s32.totalorder %s30, 0
    %p377 = por %p375, %p376
    %s378 = ssub.s32 %s24, %s31
    %p379 = scmp.eq.s32.totalorder %s378, 0
    %s381 = sadd.s32 %s380, 1
    %s382 = scalar_select %p379, %s380, %s381
    %p385 = pneg %p379
    %p386 = scmp.eq.s32.totalorder %s24, 1
    %p387 = por %p385, %p386
    %p388 = scmp.ne.s32.totalorder %s380, %s383
    %p389 = scmp.eq.s32.totalorder %s24, 0
    %p390 = por %p388, %p389
    %p391 = scmp.ne.s32.totalorder %s380, %s383
    %p392 = scmp.eq.s32.totalorder %s29, 1
    %p393 = por %p391, %p392
    %p394 = scmp.ne.s32.totalorder %s383, %s384
    %p395 = scmp.eq.s32.totalorder %s29, 0
    %p396 = por %p394, %p395
    %p397 = scmp.ne.s32.totalorder %s383, %s384
    %p398 = scmp.eq.s32.totalorder %s30, 1
    %p399 = por %p397, %p398
    %p401 = scmp.ne.s32.totalorder %s384, %s400
    %p402 = scmp.eq.s32.totalorder %s30, 0
    %p403 = por %p401, %p402
    %s404 = ssub.s32 %s24, %s31
    %p405 = scmp.eq.s32.totalorder %s404, 0
    %s407 = sadd.s32 %s406, 1
    %s408 = scalar_select %p405, %s406, %s407
    %p411 = pneg %p405
    %p412 = scmp.eq.s32.totalorder %s24, 1
    %p413 = por %p411, %p412
    %p414 = scmp.ne.s32.totalorder %s406, %s409
    %p415 = scmp.eq.s32.totalorder %s24, 0
    %p416 = por %p414, %p415
    %p417 = scmp.ne.s32.totalorder %s406, %s409
    %p418 = scmp.eq.s32.totalorder %s29, 1
    %p419 = por %p417, %p418
    %p420 = scmp.ne.s32.totalorder %s409, %s410
    %p421 = scmp.eq.s32.totalorder %s29, 0
    %p422 = por %p420, %p421
    %p423 = scmp.ne.s32.totalorder %s409, %s410
    %p424 = scmp.eq.s32.totalorder %s30, 1
    %p425 = por %p423, %p424
    %p427 = scmp.ne.s32.totalorder %s410, %s426
    %p428 = scmp.eq.s32.totalorder %s30, 0
    %p429 = por %p427, %p428
    %p430 = scmp.le.s32.totalorder 1, %s24
    %p431 = scmp.lt.s32.totalorder %s24, 3
    %p432 = pnand %p430, %p431
    %p433 = pneg %p432
    // Predicated region
    $region9: #{sup_head_forward.1} parent=5 // pred_check
      _
    $region10: #{sup_head_forward.1} parent=5 // pred_check_branch
      %435 = sbr.rel (%p432) target = $region12
    $region11: #{sup_head_forward.1} parent=5 // pred_region
      %s436 = ssub.s32 %s24, 1
      // Predicated region
      $region13: #{sup_head_forward.1} parent=11 // pred_check
        %p437 = pneg %p71
      $region14: #{sup_head_forward.1} parent=11 // pred_check_branch
        %439 = sbr.rel (%p437) target = $region16
      $region15: #{sup_head_forward.1} parent=11 // pred_region
        _
      $region16: #{sup_head_forward.1} parent=11 // pred_fallthru
        _
      // Predicated region
      $region17: #{sup_head_forward.1} parent=11 // pred_check
        %p440 = pneg %p92
      $region18: #{sup_head_forward.1} parent=11 // pred_check_branch
        %442 = sbr.rel (%p440) target = $region20
      $region19: #{sup_head_forward.1} parent=11 // pred_region
        _
      $region20: #{sup_head_forward.1} parent=11 // pred_fallthru
        _
      // Predicated region
      $region21: #{sup_head_forward.1} parent=11 // pred_check
        %p443 = pneg %p113
      $region22: #{sup_head_forward.1} parent=11 // pred_check_branch
        %445 = sbr.rel (%p443) target = $region24
      $region23: #{sup_head_forward.1} parent=11 // pred_region
        _
      $region24: #{sup_head_forward.1} parent=11 // pred_fallthru
        _
      // Predicated region
      $region25: #{sup_head_forward.1} parent=11 // pred_check
        %p446 = pneg %p134
      $region26: #{sup_head_forward.1} parent=11 // pred_check_branch
        %448 = sbr.rel (%p446) target = $region28
      $region27: #{sup_head_forward.1} parent=11 // pred_region
        _
      $region28: #{sup_head_forward.1} parent=11 // pred_fallthru
        _
      // Predicated region
      $region29: #{sup_head_forward.1} parent=11 // pred_check
        %p449 = pneg %p155
      $region30: #{sup_head_forward.1} parent=11 // pred_check_branch
        %451 = sbr.rel (%p449) target = $region32
      $region31: #{sup_head_forward.1} parent=11 // pred_region
        _
      $region32: #{sup_head_forward.1} parent=11 // pred_fallthru
        _
      // Predicated region
      $region33: #{sup_head_forward.1} parent=11 // pred_check
        %p452 = pneg %p176
      $region34: #{sup_head_forward.1} parent=11 // pred_check_branch
        %454 = sbr.rel (%p452) target = $region36
      $region35: #{sup_head_forward.1} parent=11 // pred_region
        _
      $region36: #{sup_head_forward.1} parent=11 // pred_fallthru
        _
      // Predicated region
      $region37: #{sup_head_forward.1} parent=11 // pred_check
        %p455 = pneg %p197
      $region38: #{sup_head_forward.1} parent=11 // pred_check_branch
        %457 = sbr.rel (%p455) target = $region40
      $region39: #{sup_head_forward.1} parent=11 // pred_region
        _
      $region40: #{sup_head_forward.1} parent=11 // pred_fallthru
        _
      // Predicated region
      $region41: #{sup_head_forward.1} parent=11 // pred_check
        %p458 = pneg %p218
      $region42: #{sup_head_forward.1} parent=11 // pred_check_branch
        %460 = sbr.rel (%p458) target = $region44
      $region43: #{sup_head_forward.1} parent=11 // pred_region
        _
      $region44: #{sup_head_forward.1} parent=11 // pred_fallthru
        _
      // Predicated region
      $region45: #{sup_head_forward.1} parent=11 // pred_check
        %p461 = pneg %p239
      $region46: #{sup_head_forward.1} parent=11 // pred_check_branch
        %463 = sbr.rel (%p461) target = $region48
      $region47: #{sup_head_forward.1} parent=11 // pred_region
        _
      $region48: #{sup_head_forward.1} parent=11 // pred_fallthru
        _
      // Predicated region
      $region49: #{sup_head_forward.1} parent=11 // pred_check
        %p464 = pneg %p260
      $region50: #{sup_head_forward.1} parent=11 // pred_check_branch
        %466 = sbr.rel (%p464) target = $region52
      $region51: #{sup_head_forward.1} parent=11 // pred_region
        _
      $region52: #{sup_head_forward.1} parent=11 // pred_fallthru
        _
      // Predicated region
      $region53: #{sup_head_forward.1} parent=11 // pred_check
        %p467 = pneg %p281
      $region54: #{sup_head_forward.1} parent=11 // pred_check_branch
        %469 = sbr.rel (%p467) target = $region56
      $region55: #{sup_head_forward.1} parent=11 // pred_region
        _
      $region56: #{sup_head_forward.1} parent=11 // pred_fallthru
        _
      // Predicated region
      $region57: #{sup_head_forward.1} parent=11 // pred_check
        %p470 = pneg %p302
      $region58: #{sup_head_forward.1} parent=11 // pred_check_branch
        %472 = sbr.rel (%p470) target = $region60
      $region59: #{sup_head_forward.1} parent=11 // pred_region
        _
      $region60: #{sup_head_forward.1} parent=11 // pred_fallthru
        _
      // Predicated region
      $region61: #{sup_head_forward.1} parent=11 // pred_check
        %p473 = pneg %p323
      $region62: #{sup_head_forward.1} parent=11 // pred_check_branch
        %475 = sbr.rel (%p473) target = $region64
      $region63: #{sup_head_forward.1} parent=11 // pred_region
        _
      $region64: #{sup_head_forward.1} parent=11 // pred_fallthru
        _
      // Predicated region
      $region65: #{sup_head_forward.1} parent=11 // pred_check
        %p476 = pneg %p344
      $region66: #{sup_head_forward.1} parent=11 // pred_check_branch
        %478 = sbr.rel (%p476) target = $region68
      $region67: #{sup_head_forward.1} parent=11 // pred_region
        _
      $region68: #{sup_head_forward.1} parent=11 // pred_fallthru
        _
    $region12: #{sup_head_forward.1} parent=5 // pred_fallthru
      _
    %p479 = scmp.lt.s32.totalorder %s24, 2
    // Predicated region
    $region69: #{sup_head_forward.1} parent=5 // pred_check
      %p480 = pneg %p479
    $region70: #{sup_head_forward.1} parent=5 // pred_check_branch
      %482 = sbr.rel (%p480) target = $region72
    $region71: #{sup_head_forward.1} parent=5 // pred_region
      // Predicated region
      $region73: #{sup_head_forward.1} parent=71 // pred_check
        %p483 = pneg %p44
      $region74: #{sup_head_forward.1} parent=71 // pred_check_branch
        %485 = sbr.rel (%p483) target = $region76
      $region75: #{sup_head_forward.1} parent=71 // pred_region
        %p486 = scmp.lt.s32.totalorder %s24, 1
        %s487 = scalar_select %p486, %s24, 1
        %s488 = smul.addr %s487, 2
        %s489 = smul.addr %s488, 2
        %s490 = scalar_lea.vmem %s0, %s489
      $region76: #{sup_head_forward.1} parent=71 // pred_fallthru
        _
    $region72: #{sup_head_forward.1} parent=5 // pred_fallthru
      _
    %p491 = scmp.le.s32.totalorder 1, %s24
    %p492 = scmp.lt.s32.totalorder %s24, 3
    %p493 = pnand %p491, %p492
    %p494 = pneg %p493
    // Predicated region
    $region77: #{sup_head_forward.1} parent=5 // pred_check
      _
    $region78: #{sup_head_forward.1} parent=5 // pred_check_branch
      %496 = sbr.rel (%p493) target = $region80
    $region79: #{sup_head_forward.1} parent=5 // pred_region
      %s497 = ssub.s32 %s24, 1
      %p498 = scmp.lt.s32.totalorder %s29, 1
      %s499 = scalar_select %p498, %s29, 1
      %s500 = smul.addr %s499, 2
      %s501 = smul.addr %s500, 2
      %s502 = scalar_lea.vmem %s0, %s501
      %p503 = pneg %p50
      %p504 = pneg %p47
      %p505 = pneg %p71
      %p506 = pneg %p68
      %p507 = pneg %p92
      %p508 = pneg %p89
      %p509 = pneg %p113
      %p510 = pneg %p110
      %p511 = pneg %p134
      %p512 = pneg %p131
      %p513 = pneg %p155
      %p514 = pneg %p152
      %p515 = pneg %p176
      %p516 = pneg %p173
      %p517 = pneg %p197
      %p518 = pneg %p194
      %p519 = pneg %p218
      %p520 = pneg %p215
      %p521 = pneg %p239
      %p522 = pneg %p236
      %p523 = pneg %p260
      %p524 = pneg %p257
      %p525 = pneg %p281
      %p526 = pneg %p278
      %p527 = pneg %p302
      %p528 = pneg %p299
      %p529 = pneg %p323
      %p530 = pneg %p320
      %p531 = pneg %p344
      %p532 = pneg %p341
      %p533 = pneg %p370
      %p534 = pneg %p367
      %p535 = scmp.lt.s32.totalorder %s29, 1
      %s536 = scalar_select %p535, %s29, 1
      %s537 = smul.addr %s536, 8
      %s538 = smul.addr %s537, 8
      %s539 = scalar_lea.vmem %s15, %s538
      %p540 = pneg %p396
      %p541 = pneg %p393
      %p542 = scmp.lt.s32.totalorder %s29, 1
      %s543 = scalar_select %p542, %s29, 1
      %s544 = smul.addr %s543, 4
      %s545 = smul.addr %s544, 8
      %s546 = scalar_lea.vmem %s16, %s545
      %p547 = pneg %p422
      %p548 = pneg %p419
      %p549 = scmp.lt.s32.totalorder %s29, 1
      %s550 = scalar_select %p549, %s29, 1
      %s551 = smul.addr %s550, 2
      %s552 = smul.addr %s551, 8
      %s553 = scalar_lea.vmem %s17, %s552
      %p554 = scmp.lt.s32.totalorder %s29, 1
      %s555 = scalar_select %p554, %s29, 1
      %s556 = smul.addr %s555, 2
      %s557 = smul.addr %s556, 2
      %s558 = scalar_lea.vmem %s0, %s557
      %p559 = scmp.lt.s32.totalorder %s29, 1
      %s560 = scalar_select %p559, %s29, 1
      %s561 = smul.addr %s560, 8
      %s562 = smul.addr %s561, 8
      %s563 = scalar_lea.vmem %s15, %s562
      %p564 = scmp.lt.s32.totalorder %s29, 1
      %s565 = scalar_select %p564, %s29, 1
      %s566 = smul.addr %s565, 4
      %s567 = smul.addr %s566, 8
      %s568 = scalar_lea.vmem %s16, %s567
      %p569 = scmp.lt.s32.totalorder %s29, 1
      %s570 = scalar_select %p569, %s29, 1
      %s571 = smul.addr %s570, 2
      %s572 = smul.addr %s571, 8
      %s573 = scalar_lea.vmem %s17, %s572
      %vm575 = vcmask 138240
      %576 = vst.msk [vmem:[#allocation3] sm:$0xff] %vm575, 0
      %577 = vst.msk [vmem:[#allocation3 + $0x18] sm:$0xff] %vm575, 0
      %vm578 = vcmask 277640
      %579 = vst.msk [vmem:[#allocation3 + $0x10] sm:$0xff] %vm578, 0
      %580 = vst.msk [vmem:[#allocation3 + $0x28] sm:$0xff] %vm578, 0
      %v581 = vld [vmem:[%s14] sm:$0x3]
      %v582 = vld [vmem:[%s1] sm:$0xf]
      %v583 = vld [vmem:[%s1 + $0x4] sm:$0xf]
      %v584 = vld [vmem:[%s1 + $0x8] sm:$0xf]
      %v585 = vld [vmem:[%s1 + $0xc] sm:$0xf]
      %v586 = vld [vmem:[%s558] sm:$0xf]
      %v591 = vunpack.c.l.b16 %v582
      %v592 = vunpack.c.l.b16 %v583
      %v593 = vunpack.c.l.b16 %v584
      %v594 = vunpack.c.l.b16 %v585
      %v595 = vpack.c.b16 %v592, %v591
      %v596 = vpack.c.b16 %v594, %v593
      %v599 = vunpack.c.l.s4 1983009808
      %v600 = vunpack.c.0.s8 %v599
      %v601 = vlaneseq
      %v602 = vshrl.u32 %v601, 7
      %v603 = vsub.s32 %v600, %v602
      %v604 = vrot.slane %v586, %v603
      %v605 = vcombine.high %v604, %v604
      %vm606 = vcmask 31744
      %v608 = vsel %vm606, %v595, 0
      %v611 = vsel %vm606, %v596, 0
      %vm613 = vcmask 1041408
      %v615 = vsel %vm613, %v604, 0
      %v618 = vsel %vm613, %v605, 0
      %620 = vmatprep.subr.bf16.mxu0 %v618
      %621 = vmatpush1.bf16.msra.mxu0 %v615
      %622 = vmatprep.subr.bf16.mxu0 0
      %623 = vmatpush1.bf16.msra.mxu0 0
      %624 = vmatprep.subr.bf16.mxu0 0
      %625 = vmatpush1.bf16.msra.mxu0 0
      %626 = vmatprep.subr.bf16.mxu0 0
      %627 = vmatpush1.bf16.msra.mxu0 0
      %628 = vmatprep.subr.bf16.mxu0 0
      %629 = vmatpush1.bf16.msra.mxu0 0
      %630 = vmatprep.subr.bf16.mxu0 0
      %631 = vmatpush1.bf16.msra.mxu0 0
      %632 = vmatprep.subr.bf16.mxu0 0
      %633 = vmatpush1.bf16.msra.mxu0 0
      %634 = vmatprep.subr.bf16.mxu0 0
      %635 = vmatpush1.bf16.msra.mxu0 0
      %636 = vmatprep.subr.bf16.mxu0 0
      %637 = vmatpush1.bf16.msra.mxu0 0
      %638 = vmatprep.subr.bf16.mxu0 0
      %639 = vmatpush1.bf16.msra.mxu0 0
      %640 = vmatprep.subr.bf16.mxu0 0
      %641 = vmatpush1.bf16.msra.mxu0 0
      %642 = vmatprep.subr.bf16.mxu0 0
      %643 = vmatpush1.bf16.msra.mxu0 0
      %644 = vmatprep.subr.bf16.mxu0 0
      %645 = vmatpush1.bf16.msra.mxu0 0
      %646 = vmatprep.subr.bf16.mxu0 0
      %647 = vmatpush1.bf16.msra.mxu0 0
      %648 = vmatprep.subr.bf16.mxu0 0
      %649 = vmatpush1.bf16.msra.mxu0 0
      %650 = vmatprep.subr.bf16.mxu0 0
      %651 = vmatpush1.bf16.msra.mxu0 0
      %652 = vmatprep.mubr.bf16.mxu0 0
      %653 = vmatmul.mubr.bf16.gmra.mrb[0].mxu0 %v608
      %v654 = vpop.f32.mrb[0].mxu0
      %v655 = vadd.f32 0.0, %v654
      %v656 = vpop.f32.mrb[0].mxu0
      %v657 = vadd.f32 0.0, %v656
      %v658 = vpop.f32.mrb[0].mxu0
      %v659 = vadd.f32 0.0, %v658
      %v660 = vpop.f32.mrb[0].mxu0
      %v661 = vadd.f32 0.0, %v660
      %662 = vmatprep.mubr.bf16.mxu0 0
      %663 = vmatmul.mubr.bf16.gmra.mrb[0].mxu0 %v611
      %v664 = vpop.f32.mrb[0].mxu0
      %v665 = vadd.f32 0.0, %v664
      %v666 = vpop.f32.mrb[0].mxu0
      %v667 = vadd.f32 0.0, %v666
      %v668 = vpop.f32.mrb[0].mxu0
      %v669 = vadd.f32 0.0, %v668
      %v670 = vpop.f32.mrb[0].mxu0
      %v671 = vadd.f32 0.0, %v670
      %672 = vdwg.mxu0
      %v673 = vld [vmem:[%s2] sm:$0xff]
      %v674 = vld [vmem:[%s2 + $0x8] sm:$0xff]
      %v675 = vld [vmem:[%s2 + $0x10] sm:$0xff]
      %v676 = vld [vmem:[%s2 + $0x18] sm:$0xff]
      %678 = vset.pattern.permute.xlu0 0
      %679 = vperm.xlu0 %678, %v673
      %v680 = vpop.permute.xlu0 %679
      %683 = vset.pattern.permute.xlu0 0
      %684 = vperm.xlu0 %683, %v674
      %v685 = vpop.permute.xlu0 %684
      %688 = vset.pattern.permute.xlu0 0
      %689 = vperm.xlu0 %688, %v675
      %v690 = vpop.permute.xlu0 %689
      %693 = vset.pattern.permute.xlu0 0
      %694 = vperm.xlu0 %693, %v676
      %v695 = vpop.permute.xlu0 %694
      %v697 = vmul.f32 %v655, %v680
      %v698 = vmul.f32 %v657, %v680
      %v699 = vmul.f32 %v659, %v685
      %v700 = vmul.f32 %v661, %v685
      %v701 = vmul.f32 %v665, %v690
      %v702 = vmul.f32 %v667, %v690
      %v703 = vmul.f32 %v669, %v695
      %v704 = vmul.f32 %v671, %v695
      %v705 = vld [vmem:[%s3] sm:$0xff]
      %v706 = vld [vmem:[%s3 + $0x8] sm:$0xff]
      %v707 = vld [vmem:[%s3 + $0x10] sm:$0xff]
      %v708 = vld [vmem:[%s3 + $0x18] sm:$0xff]
      %710 = vset.pattern.permute.xlu0 0
      %711 = vperm.xlu0 %710, %v705
      %v712 = vpop.permute.xlu0 %711
      %715 = vset.pattern.permute.xlu0 0
      %716 = vperm.xlu0 %715, %v706
      %v717 = vpop.permute.xlu0 %716
      %720 = vset.pattern.permute.xlu0 0
      %721 = vperm.xlu0 %720, %v707
      %v722 = vpop.permute.xlu0 %721
      %725 = vset.pattern.permute.xlu0 0
      %726 = vperm.xlu0 %725, %v708
      %v727 = vpop.permute.xlu0 %726
      %v729 = vadd.f32 %v697, %v712
      %v730 = vadd.f32 %v698, %v712
      %v731 = vadd.f32 %v699, %v717
      %v732 = vadd.f32 %v700, %v717
      %v733 = vadd.f32 %v701, %v722
      %v734 = vadd.f32 %v702, %v722
      %v735 = vadd.f32 %v703, %v727
      %v736 = vadd.f32 %v704, %v727
      %737 = vst [vmem:[#allocation2] sm:$0xff] %v729
      %738 = vst [vmem:[#allocation2 + $0x8] sm:$0xff] %v730
      %739 = vst [vmem:[#allocation2 + $0x10] sm:$0xff] %v731
      %740 = vst [vmem:[#allocation2 + $0x18] sm:$0xff] %v732
      %741 = vst [vmem:[#allocation2 + $0x20] sm:$0xff] %v733
      %742 = vst [vmem:[#allocation2 + $0x28] sm:$0xff] %v734
      %743 = vst [vmem:[#allocation2 + $0x30] sm:$0xff] %v735
      %744 = vst [vmem:[#allocation2 + $0x38] sm:$0xff] %v736
      %v745 = vpack.c.bf16 %v731, %v729
      %v746 = vpack.c.bf16 %v732, %v730
      %v747 = vpack.c.bf16 %v735, %v733
      %v748 = vpack.c.bf16 %v736, %v734
      %753 = vrot.lane.b32.xlu0 %v745, 17
      %v754 = vpop.permute.xlu0 %753
      %755 = vrot.lane.b32.xlu0 %v746, 17
      %v756 = vpop.permute.xlu0 %755
      %757 = vrot.lane.b32.xlu0 %v747, 17
      %v758 = vpop.permute.xlu0 %757
      %759 = vrot.lane.b32.xlu0 %v748, 17
      %v760 = vpop.permute.xlu0 %759
      %vm761 = vcmask 138240
      %v762 = vsel %vm761, %v754, %v756
      %v763 = vsel %vm761, %v758, %v760
      %vm770 = vcmask 1047688
      %771 = vst.msk [vmem:[#allocation3] sm:$0xff] %vm770, %v754
      %772 = vst [vmem:[#allocation3 + $0x8] sm:$0xff] %v762
      %773 = vst.msk [vmem:[#allocation3 + $0x10] sm:$0xff] %vm575, %v756
      %774 = vst.msk [vmem:[#allocation3 + $0x18] sm:$0xff] %vm770, %v758
      %775 = vst [vmem:[#allocation3 + $0x20] sm:$0xff] %v763
      %776 = vst.msk [vmem:[#allocation3 + $0x28] sm:$0xff] %vm575, %v760
      %v777 = vld [vmem:[#allocation3] sm:$0xff]
      %v778 = vld [vmem:[#allocation3 + $0x8] sm:$0xff]
      %v779 = vld [vmem:[#allocation3 + $0x18] sm:$0xff]
      %v780 = vld [vmem:[#allocation3 + $0x20] sm:$0xff]
      %v783 = vunpack.c.l.s4 1966171168
      %v784 = vunpack.c.0.s8 %v783
      %v785 = vlaneseq
      %v786 = vshrl.u32 %v785, 7
      %v787 = vsub.s32 %v784, %v786
      %v788 = vrot.slane %v581, %v787
      %v789 = vcombine.high %v788, %v788
      %v791 = vunpack.c.l.s4 1966171168
      %v792 = vunpack.c.0.s8 %v791
      %v793 = vlaneseq
      %v794 = vshrl.u32 %v793, 7
      %v795 = vsub.s32 %v792, %v794
      %v796 = vrot.slane %v788, %v795
      %v798 = vunpack.c.l.s4 1966171168
      %v799 = vunpack.c.0.s8 %v798
      %v800 = vlaneseq
      %v801 = vshrl.u32 %v800, 7
      %v802 = vsub.s32 %v799, %v801
      %v803 = vrot.slane %v789, %v802
      %v805 = vpack.i.b16 %v796, %v796
      %v807 = vlaneseq
      %v808 = vshrl.u32 %v807, 7
      %v809 = vsub.s32 0, %v808
      %v810 = vrot.slane %v805, %v809
      %v812 = vpack.i.b16 %v803, %v803
      %v814 = vlaneseq
      %v815 = vshrl.u32 %v814, 7
      %v816 = vsub.s32 0, %v815
      %v817 = vrot.slane %v812, %v816
      %v818 = vmul.bf16 %v777, %v810
      %v819 = vmul.bf16 %v778, %v817
      %v820 = vmul.bf16 %v779, %v810
      %v821 = vmul.bf16 %v780, %v817
      %822 = vst [vmem:[#allocation4] sm:$0xff] %v818
      %823 = vst [vmem:[#allocation4 + $0x8] sm:$0xff] %v819
      %824 = vst [vmem:[#allocation4 + $0x10] sm:$0xff] %v820
      %825 = vst [vmem:[#allocation4 + $0x18] sm:$0xff] %v821
      %v826 = vld [vmem:[#allocation3] sm:$0xff]
      %v827 = vld [vmem:[#allocation3 + $0x8] sm:$0xff]
      %v828 = vld [vmem:[#allocation3 + $0x10] sm:$0xff]
      %v829 = vld [vmem:[#allocation3 + $0x18] sm:$0xff]
      %v830 = vld [vmem:[#allocation3 + $0x20] sm:$0xff]
      %v831 = vld [vmem:[#allocation3 + $0x28] sm:$0xff]
      %838 = vrot.lane.b32.xlu0 %v826, 127
      %v839 = vpop.permute.xlu0 %838
      %840 = vrot.lane.b32.xlu0 %v827, 127
      %v841 = vpop.permute.xlu0 %840
      %842 = vrot.lane.b32.xlu0 %v828, 127
      %v843 = vpop.permute.xlu0 %842
      %844 = vrot.lane.b32.xlu0 %v829, 127
      %v845 = vpop.permute.xlu0 %844
      %846 = vrot.lane.b32.xlu0 %v830, 127
      %v847 = vpop.permute.xlu0 %846
      %848 = vrot.lane.b32.xlu0 %v831, 127
      %v849 = vpop.permute.xlu0 %848
      %vm850 = vcmask 1039360
      %v851 = vsel %vm850, %v839, %v841
      %v852 = vsel %vm850, %v841, %v843
      %v853 = vsel %vm850, %v845, %v847
      %v854 = vsel %vm850, %v847, %v849
      %859 = vst [vmem:[#allocation4 + $0x20] sm:$0xff] %v851
      %860 = vst [vmem:[#allocation4 + $0x28] sm:$0xff] %v852
      %861 = vst [vmem:[#allocation4 + $0x30] sm:$0xff] %v853
      %862 = vst [vmem:[#allocation4 + $0x38] sm:$0xff] %v854
      %v863 = vld [vmem:[#allocation3] sm:$0xff]
      %v864 = vld [vmem:[#allocation3 + $0x8] sm:$0xff]
      %v865 = vld [vmem:[#allocation3 + $0x10] sm:$0xff]
      %v866 = vld [vmem:[#allocation3 + $0x18] sm:$0xff]
      %v867 = vld [vmem:[#allocation3 + $0x20] sm:$0xff]
      %v868 = vld [vmem:[#allocation3 + $0x28] sm:$0xff]
      %v869 = vshrl.u32 %v796, 16
      %v870 = vpack.i.b16 %v869, %v869
      %v872 = vlaneseq
      %v873 = vshrl.u32 %v872, 7
      %v874 = vsub.s32 0, %v873
      %v875 = vrot.slane %v870, %v874
      %v876 = vshrl.u32 %v803, 16
      %v877 = vpack.i.b16 %v876, %v876
      %v879 = vlaneseq
      %v880 = vshrl.u32 %v879, 7
      %v881 = vsub.s32 0, %v880
      %v882 = vrot.slane %v877, %v881
      %885 = vrot.lane.b32.xlu0 %v875, 2
      %v886 = vpop.permute.xlu0 %885
      %887 = vrot.lane.b32.xlu0 %v882, 2
      %v888 = vpop.permute.xlu0 %887
      %vm889 = vcmask 15360
      %v890 = vsel %vm889, %v886, %v888
      %v894 = vmul.bf16 %v863, %v886
      %v895 = vmul.bf16 %v864, %v890
      %v896 = vmul.bf16 %v865, %v888
      %v897 = vmul.bf16 %v866, %v886
      %v898 = vmul.bf16 %v867, %v890
      %v899 = vmul.bf16 %v868, %v888
      %906 = vrot.lane.b32.xlu0 %v894, 126
      %v907 = vpop.permute.xlu0 %906
      %908 = vrot.lane.b32.xlu0 %v895, 126
      %v909 = vpop.permute.xlu0 %908
      %910 = vrot.lane.b32.xlu0 %v896, 126
      %v911 = vpop.permute.xlu0 %910
      %912 = vrot.lane.b32.xlu0 %v897, 126
      %v913 = vpop.permute.xlu0 %912
      %914 = vrot.lane.b32.xlu0 %v898, 126
      %v915 = vpop.permute.xlu0 %914
      %916 = vrot.lane.b32.xlu0 %v899, 126
      %v917 = vpop.permute.xlu0 %916
      %vm918 = vcmask 1031168
      %v919 = vsel %vm918, %v907, %v909
      %v920 = vsel %vm918, %v909, %v911
      %v921 = vsel %vm918, %v913, %v915
      %v922 = vsel %vm918, %v915, %v917
      %927 = vst [vmem:[#allocation4 + $0x40] sm:$0xff] %v919
      %928 = vst [vmem:[#allocation4 + $0x48] sm:$0xff] %v920
      %929 = vst [vmem:[#allocation4 + $0x50] sm:$0xff] %v921
      %930 = vst [vmem:[#allocation4 + $0x58] sm:$0xff] %v922
      %v931 = vld [vmem:[#allocation3] sm:$0xff]
      %v932 = vld [vmem:[#allocation3 + $0x8] sm:$0xff]
      %v933 = vld [vmem:[#allocation3 + $0x10] sm:$0xff]
      %v934 = vld [vmem:[#allocation3 + $0x18] sm:$0xff]
      %v935 = vld [vmem:[#allocation3 + $0x20] sm:$0xff]
      %v936 = vld [vmem:[#allocation3 + $0x28] sm:$0xff]
      %939 = vrot.lane.b32.xlu0 %v810, 16
      %v940 = vpop.permute.xlu0 %939
      %941 = vrot.lane.b32.xlu0 %v817, 16
      %v942 = vpop.permute.xlu0 %941
      %vm943 = vcmask 130048
      %v944 = vsel %vm943, %v940, %v942
      %v948 = vmul.bf16 %v931, %v940
      %v949 = vmul.bf16 %v932, %v944
      %v950 = vmul.bf16 %v933, %v942
      %v951 = vmul.bf16 %v934, %v940
      %v952 = vmul.bf16 %v935, %v944
      %v953 = vmul.bf16 %v936, %v942
      %960 = vrot.lane.b32.xlu0 %v948, 112
      %v961 = vpop.permute.xlu0 %960
      %962 = vrot.lane.b32.xlu0 %v949, 112
      %v963 = vpop.permute.xlu0 %962
      %964 = vrot.lane.b32.xlu0 %v950, 112
      %v965 = vpop.permute.xlu0 %964
      %966 = vrot.lane.b32.xlu0 %v951, 112
      %v967 = vpop.permute.xlu0 %966
      %968 = vrot.lane.b32.xlu0 %v952, 112
      %v969 = vpop.permute.xlu0 %968
      %970 = vrot.lane.b32.xlu0 %v953, 112
      %v971 = vpop.permute.xlu0 %970
      %vm972 = vcmask 916480
      %v973 = vsel %vm972, %v961, %v963
      %v974 = vsel %vm972, %v963, %v965
      %v975 = vsel %vm972, %v967, %v969
      %v976 = vsel %vm972, %v969, %v971
      %981 = vst [vmem:[#allocation4 + $0x60] sm:$0xff] %v973
      %982 = vst [vmem:[#allocation4 + $0x68] sm:$0xff] %v974
      %983 = vst [vmem:[#allocation4 + $0x70] sm:$0xff] %v975
      %984 = vst [vmem:[#allocation4 + $0x78] sm:$0xff] %v976
      %v985 = vld [vmem:[#allocation3] sm:$0xff]
      %v986 = vld [vmem:[#allocation3 + $0x8] sm:$0xff]
      %v987 = vld [vmem:[#allocation3 + $0x10] sm:$0xff]
      %v988 = vld [vmem:[#allocation3 + $0x18] sm:$0xff]
      %v989 = vld [vmem:[#allocation3 + $0x20] sm:$0xff]
      %v990 = vld [vmem:[#allocation3 + $0x28] sm:$0xff]
      %997 = vrot.lane.b32.xlu0 %v985, 111
      %v998 = vpop.permute.xlu0 %997
      %999 = vrot.lane.b32.xlu0 %v986, 111
      %v1000 = vpop.permute.xlu0 %999
      %1001 = vrot.lane.b32.xlu0 %v987, 111
      %v1002 = vpop.permute.xlu0 %1001
      %1003 = vrot.lane.b32.xlu0 %v988, 111
      %v1004 = vpop.permute.xlu0 %1003
      %1005 = vrot.lane.b32.xlu0 %v989, 111
      %v1006 = vpop.permute.xlu0 %1005
      %1007 = vrot.lane.b32.xlu0 %v990, 111
      %v1008 = vpop.permute.xlu0 %1007
      %vm1009 = vcmask 908288
      %v1010 = vsel %vm1009, %v998, %v1000
      %v1011 = vsel %vm1009, %v1000, %v1002
      %v1012 = vsel %vm1009, %v1004, %v1006
      %v1013 = vsel %vm1009, %v1006, %v1008
      %1018 = vst [vmem:[#allocation4 + $0x80] sm:$0xff] %v1010
      %1019 = vst [vmem:[#allocation4 + $0x88] sm:$0xff] %v1011
      %1020 = vst [vmem:[#allocation4 + $0x90] sm:$0xff] %v1012
      %1021 = vst [vmem:[#allocation4 + $0x98] sm:$0xff] %v1013
      %v1022 = vld [vmem:[#allocation3] sm:$0xff]
      %v1023 = vld [vmem:[#allocation3 + $0x8] sm:$0xff]
      %v1024 = vld [vmem:[#allocation3 + $0x10] sm:$0xff]
      %v1025 = vld [vmem:[#allocation3 + $0x18] sm:$0xff]
      %v1026 = vld [vmem:[#allocation3 + $0x20] sm:$0xff]
      %v1027 = vld [vmem:[#allocation3 + $0x28] sm:$0xff]
      %1028 = vrot.lane.b32.xlu0 %v875, 18
      %v1029 = vpop.permute.xlu0 %1028
      %1030 = vrot.lane.b32.xlu0 %v882, 18
      %v1031 = vpop.permute.xlu0 %1030
      %vm1032 = vcmask 146432
      %v1033 = vsel %vm1032, %v1029, %v1031
      %v1037 = vmul.bf16 %v1022, %v1029
      %v1038 = vmul.bf16 %v1023, %v1033
      %v1039 = vmul.bf16 %v1024, %v1031
      %v1040 = vmul.bf16 %v1025, %v1029
      %v1041 = vmul.bf16 %v1026, %v1033
      %v1042 = vmul.bf16 %v1027, %v1031
      %1049 = vrot.lane.b32.xlu0 %v1037, 110
      %v1050 = vpop.permute.xlu0 %1049
      %1051 = vrot.lane.b32.xlu0 %v1038, 110
      %v1052 = vpop.permute.xlu0 %1051
      %1053 = vrot.lane.b32.xlu0 %v1039, 110
      %v1054 = vpop.permute.xlu0 %1053
      %1055 = vrot.lane.b32.xlu0 %v1040, 110
      %v1056 = vpop.permute.xlu0 %1055
      %1057 = vrot.lane.b32.xlu0 %v1041, 110
      %v1058 = vpop.permute.xlu0 %1057
      %1059 = vrot.lane.b32.xlu0 %v1042, 110
      %v1060 = vpop.permute.xlu0 %1059
      %vm1061 = vcmask 900096
      %v1062 = vsel %vm1061, %v1050, %v1052
      %v1063 = vsel %vm1061, %v1052, %v1054
      %v1064 = vsel %vm1061, %v1056, %v1058
      %v1065 = vsel %vm1061, %v1058, %v1060
      %1070 = vst [vmem:[#allocation4 + $0xa0] sm:$0xff] %v1062
      %1071 = vst [vmem:[#allocation4 + $0xa8] sm:$0xff] %v1063
      %1072 = vst [vmem:[#allocation4 + $0xb0] sm:$0xff] %v1064
      %1073 = vst [vmem:[#allocation4 + $0xb8] sm:$0xff] %v1065
      %v1074 = vld [vmem:[#allocation3] sm:$0xff]
      %v1075 = vld [vmem:[#allocation3 + $0x8] sm:$0xff]
      %v1076 = vld [vmem:[#allocation3 + $0x10] sm:$0xff]
      %v1077 = vld [vmem:[#allocation3 + $0x18] sm:$0xff]
      %v1078 = vld [vmem:[#allocation3 + $0x20] sm:$0xff]
      %v1079 = vld [vmem:[#allocation3 + $0x28] sm:$0xff]
      %1080 = vrot.lane.b32.xlu0 %v810, 32
      %v1081 = vpop.permute.xlu0 %1080
      %1082 = vrot.lane.b32.xlu0 %v817, 32
      %v1083 = vpop.permute.xlu0 %1082
      %vm1084 = vcmask 261120
      %v1085 = vsel %vm1084, %v1081, %v1083
      %v1089 = vmul.bf16 %v1074, %v1081
      %v1090 = vmul.bf16 %v1075, %v1085
      %v1091 = vmul.bf16 %v1076, %v1083
      %v1092 = vmul.bf16 %v1077, %v1081
      %v1093 = vmul.bf16 %v1078, %v1085
      %v1094 = vmul.bf16 %v1079, %v1083
      %1101 = vrot.lane.b32.xlu0 %v1089, 96
      %v1102 = vpop.permute.xlu0 %1101
      %1103 = vrot.lane.b32.xlu0 %v1090, 96
      %v1104 = vpop.permute.xlu0 %1103
      %1105 = vrot.lane.b32.xlu0 %v1091, 96
      %v1106 = vpop.permute.xlu0 %1105
      %1107 = vrot.lane.b32.xlu0 %v1092, 96
      %v1108 = vpop.permute.xlu0 %1107
      %1109 = vrot.lane.b32.xlu0 %v1093, 96
      %v1110 = vpop.permute.xlu0 %1109
      %1111 = vrot.lane.b32.xlu0 %v1094, 96
      %v1112 = vpop.permute.xlu0 %1111
      %vm1113 = vcmask 785408
      %v1114 = vsel %vm1113, %v1102, %v1104
      %v1115 = vsel %vm1113, %v1104, %v1106
      %v1116 = vsel %vm1113, %v1108, %v1110
      %v1117 = vsel %vm1113, %v1110, %v1112
      %1122 = vst [vmem:[#allocation4 + $0xc0] sm:$0xff] %v1114
      %1123 = vst [vmem:[#allocation4 + $0xc8] sm:$0xff] %v1115
      %1124 = vst [vmem:[#allocation4 + $0xd0] sm:$0xff] %v1116
      %1125 = vst [vmem:[#allocation4 + $0xd8] sm:$0xff] %v1117
      %v1126 = vld [vmem:[#allocation3] sm:$0xff]
      %v1127 = vld [vmem:[#allocation3 + $0x8] sm:$0xff]
      %v1128 = vld [vmem:[#allocation3 + $0x10] sm:$0xff]
      %v1129 = vld [vmem:[#allocation3 + $0x18] sm:$0xff]
      %v1130 = vld [vmem:[#allocation3 + $0x20] sm:$0xff]
      %v1131 = vld [vmem:[#allocation3 + $0x28] sm:$0xff]
      %1138 = vrot.lane.b32.xlu0 %v1126, 95
      %v1139 = vpop.permute.xlu0 %1138
      %1140 = vrot.lane.b32.xlu0 %v1127, 95
      %v1141 = vpop.permute.xlu0 %1140
      %1142 = vrot.lane.b32.xlu0 %v1128, 95
      %v1143 = vpop.permute.xlu0 %1142
      %1144 = vrot.lane.b32.xlu0 %v1129, 95
      %v1145 = vpop.permute.xlu0 %1144
      %1146 = vrot.lane.b32.xlu0 %v1130, 95
      %v1147 = vpop.permute.xlu0 %1146
      %1148 = vrot.lane.b32.xlu0 %v1131, 95
      %v1149 = vpop.permute.xlu0 %1148
      %vm1150 = vcmask 777216
      %v1151 = vsel %vm1150, %v1139, %v1141
      %v1152 = vsel %vm1150, %v1141, %v1143
      %v1153 = vsel %vm1150, %v1145, %v1147
      %v1154 = vsel %vm1150, %v1147, %v1149
      %1159 = vst [vmem:[#allocation4 + $0xe0] sm:$0xff] %v1151
      %1160 = vst [vmem:[#allocation4 + $0xe8] sm:$0xff] %v1152
      %1161 = vst [vmem:[#allocation4 + $0xf0] sm:$0xff] %v1153
      %1162 = vst [vmem:[#allocation4 + $0xf8] sm:$0xff] %v1154
      %v1163 = vld [vmem:[#allocation3] sm:$0xff]
      %v1164 = vld [vmem:[#allocation3 + $0x8] sm:$0xff]
      %v1165 = vld [vmem:[#allocation3 + $0x10] sm:$0xff]
      %v1166 = vld [vmem:[#allocation3 + $0x18] sm:$0xff]
      %v1167 = vld [vmem:[#allocation3 + $0x20] sm:$0xff]
      %v1168 = vld [vmem:[#allocation3 + $0x28] sm:$0xff]
      %1169 = vrot.lane.b32.xlu0 %v875, 34
      %v1170 = vpop.permute.xlu0 %1169
      %1171 = vrot.lane.b32.xlu0 %v882, 34
      %v1172 = vpop.permute.xlu0 %1171
      %vm1173 = vcmask 277504
      %v1174 = vsel %vm1173, %v1170, %v1172
      %v1178 = vmul.bf16 %v1163, %v1170
      %v1179 = vmul.bf16 %v1164, %v1174
      %v1180 = vmul.bf16 %v1165, %v1172
      %v1181 = vmul.bf16 %v1166, %v1170
      %v1182 = vmul.bf16 %v1167, %v1174
      %v1183 = vmul.bf16 %v1168, %v1172
      %1190 = vrot.lane.b32.xlu0 %v1178, 94
      %v1191 = vpop.permute.xlu0 %1190
      %1192 = vrot.lane.b32.xlu0 %v1179, 94
      %v1193 = vpop.permute.xlu0 %1192
      %1194 = vrot.lane.b32.xlu0 %v1180, 94
      %v1195 = vpop.permute.xlu0 %1194
      %1196 = vrot.lane.b32.xlu0 %v1181, 94
      %v1197 = vpop.permute.xlu0 %1196
      %1198 = vrot.lane.b32.xlu0 %v1182, 94
      %v1199 = vpop.permute.xlu0 %1198
      %1200 = vrot.lane.b32.xlu0 %v1183, 94
      %v1201 = vpop.permute.xlu0 %1200
      %vm1202 = vcmask 769024
      %v1203 = vsel %vm1202, %v1191, %v1193
      %v1204 = vsel %vm1202, %v1193, %v1195
      %v1205 = vsel %vm1202, %v1197, %v1199
      %v1206 = vsel %vm1202, %v1199, %v1201
      %1211 = vst [vmem:[#allocation4 + $0x100] sm:$0xff] %v1203
      %1212 = vst [vmem:[#allocation4 + $0x108] sm:$0xff] %v1204
      %1213 = vst [vmem:[#allocation4 + $0x110] sm:$0xff] %v1205
      %1214 = vst [vmem:[#allocation4 + $0x118] sm:$0xff] %v1206
      %v1215 = vld [vmem:[%s4] sm:$0xff]
      %v1216 = vld [vmem:[%s4 + $0x8] sm:$0xf]
      %v1217 = vld [vmem:[%s4 + $0xc] sm:$0xff]
      %v1218 = vld [vmem:[%s4 + $0x14] sm:$0xf]
      %v1219 = vld [vmem:[%s4 + $0x18] sm:$0xff]
      %v1220 = vld [vmem:[%s4 + $0x20] sm:$0xf]
      %v1221 = vld [vmem:[%s4 + $0x24] sm:$0xff]
      %v1222 = vld [vmem:[%s4 + $0x2c] sm:$0xf]
      %v1223 = vld [vmem:[#allocation4] sm:$0xff]
      %v1224 = vld [vmem:[#allocation4 + $0x8] sm:$0xff]
      %v1225 = vld [vmem:[#allocation4 + $0x10] sm:$0xff]
      %v1226 = vld [vmem:[#allocation4 + $0x18] sm:$0xff]
      %v1227 = vld [vmem:[#allocation4 + $0x20] sm:$0xff]
      %v1228 = vld [vmem:[#allocation4 + $0x28] sm:$0xff]
      %v1229 = vld [vmem:[#allocation4 + $0x30] sm:$0xff]
      %v1230 = vld [vmem:[#allocation4 + $0x38] sm:$0xff]
      %v1231 = vld [vmem:[#allocation4 + $0x40] sm:$0xff]
      %v1232 = vld [vmem:[#allocation4 + $0x48] sm:$0xff]
      %v1233 = vld [vmem:[#allocation4 + $0x50] sm:$0xff]
      %v1234 = vld [vmem:[#allocation4 + $0x58] sm:$0xff]
      %v1235 = vld [vmem:[#allocation4 + $0x60] sm:$0xff]
      %v1236 = vld [vmem:[#allocation4 + $0x68] sm:$0xff]
      %v1237 = vld [vmem:[#allocation4 + $0x70] sm:$0xff]
      %v1238 = vld [vmem:[#allocation4 + $0x78] sm:$0xff]
      %v1239 = vld [vmem:[#allocation4 + $0x80] sm:$0xff]
      %v1240 = vld [vmem:[#allocation4 + $0x88] sm:$0xff]
      %v1241 = vld [vmem:[#allocation4 + $0x90] sm:$0xff]
      %v1242 = vld [vmem:[#allocation4 + $0x98] sm:$0xff]
      %v1243 = vld [vmem:[#allocation4 + $0xa0] sm:$0xff]
      %v1244 = vld [vmem:[#allocation4 + $0xa8] sm:$0xff]
      %v1245 = vld [vmem:[#allocation4 + $0xb0] sm:$0xff]
      %v1246 = vld [vmem:[#allocation4 + $0xb8] sm:$0xff]
      %v1247 = vld [vmem:[#allocation4 + $0xc0] sm:$0xff]
      %v1248 = vld [vmem:[#allocation4 + $0xc8] sm:$0xff]
      %v1249 = vld [vmem:[#allocation4 + $0xd0] sm:$0xff]
      %v1250 = vld [vmem:[#allocation4 + $0xd8] sm:$0xff]
      %v1251 = vld [vmem:[#allocation4 + $0xe0] sm:$0xff]
      %v1252 = vld [vmem:[#allocation4 + $0xe8] sm:$0xff]
      %v1253 = vld [vmem:[#allocation4 + $0xf0] sm:$0xff]
      %v1254 = vld [vmem:[#allocation4 + $0xf8] sm:$0xff]
      %v1255 = vld [vmem:[#allocation4 + $0x100] sm:$0xff]
      %v1256 = vld [vmem:[#allocation4 + $0x108] sm:$0xff]
      %v1257 = vld [vmem:[#allocation4 + $0x110] sm:$0xff]
      %v1258 = vld [vmem:[#allocation4 + $0x118] sm:$0xff]
      %v1267 = vunpack.c.l.b16 %v1215
      %v1268 = vunpack.c.h.b16 %v1215
      %v1269 = vunpack.c.l.b16 %v1216
      %v1270 = vunpack.c.l.b16 %v1217
      %v1271 = vunpack.c.h.b16 %v1217
      %v1272 = vunpack.c.l.b16 %v1218
      %v1273 = vunpack.c.l.b16 %v1219
      %v1274 = vunpack.c.h.b16 %v1219
      %v1275 = vunpack.c.l.b16 %v1220
      %v1276 = vunpack.c.l.b16 %v1221
      %v1277 = vunpack.c.h.b16 %v1221
      %v1278 = vunpack.c.l.b16 %v1222
      %v1279 = vpack.c.b16 %v1270, %v1267
      %v1280 = vpack.c.b16 %v1271, %v1268
      %v1281 = vpack.c.b16 %v1272, %v1269
      %v1282 = vpack.c.b16 %v1276, %v1273
      %v1283 = vpack.c.b16 %v1277, %v1274
      %v1284 = vpack.c.b16 %v1278, %v1275
      %vm1289 = vcmask 261120
      %v1291 = vsel %vm1289, %v1281, 0
      %v1294 = vsel %vm1289, %v1284, 0
      %1296 = vmatprep.subr.bf16.mxu0 %v1224
      %1297 = vmatpush1.bf16.msra.mxu0 %v1223
      %1298 = vmatprep.subr.bf16.mxu0 %v1226
      %1299 = vmatpush1.bf16.msra.mxu0 %v1225
      %1300 = vmatprep.subr.bf16.mxu0 %v1228
      %1301 = vmatpush1.bf16.msra.mxu0 %v1227
      %1302 = vmatprep.subr.bf16.mxu0 %v1230
      %1303 = vmatpush1.bf16.msra.mxu0 %v1229
      %1304 = vmatprep.subr.bf16.mxu0 %v1232
      %1305 = vmatpush1.bf16.msra.mxu0 %v1231
      %1306 = vmatprep.subr.bf16.mxu0 %v1234
      %1307 = vmatpush1.bf16.msra.mxu0 %v1233
      %1308 = vmatprep.subr.bf16.mxu0 %v1236
      %1309 = vmatpush1.bf16.msra.mxu0 %v1235
      %1310 = vmatprep.subr.bf16.mxu0 %v1238
      %1311 = vmatpush1.bf16.msra.mxu0 %v1237
      %1312 = vmatprep.subr.bf16.mxu0 %v1240
      %1313 = vmatpush1.bf16.msra.mxu0 %v1239
      %1314 = vmatprep.subr.bf16.mxu0 %v1242
      %1315 = vmatpush1.bf16.msra.mxu0 %v1241
      %1316 = vmatprep.subr.bf16.mxu0 %v1244
      %1317 = vmatpush1.bf16.msra.mxu0 %v1243
      %1318 = vmatprep.subr.bf16.mxu0 %v1246
      %1319 = vmatpush1.bf16.msra.mxu0 %v1245
      %1320 = vmatprep.subr.bf16.mxu0 %v1248
      %1321 = vmatpush1.bf16.msra.mxu0 %v1247
      %1322 = vmatprep.subr.bf16.mxu0 %v1250
      %1323 = vmatpush1.bf16.msra.mxu0 %v1249
      %1324 = vmatprep.subr.bf16.mxu0 %v1252
      %1325 = vmatpush1.bf16.msra.mxu0 %v1251
      %1326 = vmatprep.subr.bf16.mxu0 %v1254
      %1327 = vmatpush1.bf16.msra.mxu0 %v1253
      %1328 = vmatprep.mubr.bf16.mxu0 %v1280
      %1329 = vmatmul.mubr.bf16.gmra.mrb[0].mxu0 %v1279
      %v1330 = vpop.f32.mrb[0].mxu0
      %v1331 = vadd.f32 0.0, %v1330
      %v1332 = vpop.f32.mrb[0].mxu0
      %v1333 = vadd.f32 0.0, %v1332
      %v1334 = vpop.f32.mrb[0].mxu0
      %v1335 = vadd.f32 0.0, %v1334
      %v1336 = vpop.f32.mrb[0].mxu0
      %v1337 = vadd.f32 0.0, %v1336
      %1338 = vmatprep.mubr.bf16.mxu0 %v1283
      %1339 = vmatmul.mubr.bf16.gmra.mrb[0].mxu0 %v1282
      %v1340 = vpop.f32.mrb[0].mxu0
      %v1341 = vadd.f32 0.0, %v1340
      %v1342 = vpop.f32.mrb[0].mxu0
      %v1343 = vadd.f32 0.0, %v1342
      %v1344 = vpop.f32.mrb[0].mxu0
      %v1345 = vadd.f32 0.0, %v1344
      %v1346 = vpop.f32.mrb[0].mxu0
      %v1347 = vadd.f32 0.0, %v1346
      %1348 = vdwg.mxu0
      %1349 = vmatprep.subr.bf16.mxu0 %v1256
      %1350 = vmatpush1.bf16.msra.mxu0 %v1255
      %1351 = vmatprep.subr.bf16.mxu0 %v1258
      %1352 = vmatpush1.bf16.msra.mxu0 %v1257
      %1353 = vmatprep.subr.bf16.mxu0 0
      %1354 = vmatpush1.bf16.msra.mxu0 0
      %1355 = vmatprep.subr.bf16.mxu0 0
      %1356 = vmatpush1.bf16.msra.mxu0 0
      %1357 = vmatprep.subr.bf16.mxu0 0
      %1358 = vmatpush1.bf16.msra.mxu0 0
      %1359 = vmatprep.subr.bf16.mxu0 0
      %1360 = vmatpush1.bf16.msra.mxu0 0
      %1361 = vmatprep.subr.bf16.mxu0 0
      %1362 = vmatpush1.bf16.msra.mxu0 0
      %1363 = vmatprep.subr.bf16.mxu0 0
      %1364 = vmatpush1.bf16.msra.mxu0 0
      %1365 = vmatprep.subr.bf16.mxu0 0
      %1366 = vmatpush1.bf16.msra.mxu0 0
      %1367 = vmatprep.subr.bf16.mxu0 0
      %1368 = vmatpush1.bf16.msra.mxu0 0
      %1369 = vmatprep.subr.bf16.mxu0 0
      %1370 = vmatpush1.bf16.msra.mxu0 0
      %1371 = vmatprep.subr.bf16.mxu0 0
      %1372 = vmatpush1.bf16.msra.mxu0 0
      %1373 = vmatprep.subr.bf16.mxu0 0
      %1374 = vmatpush1.bf16.msra.mxu0 0
      %1375 = vmatprep.subr.bf16.mxu0 0
      %1376 = vmatpush1.bf16.msra.mxu0 0
      %1377 = vmatprep.subr.bf16.mxu0 0
      %1378 = vmatpush1.bf16.msra.mxu0 0
      %1379 = vmatprep.subr.bf16.mxu0 0
      %1380 = vmatpush1.bf16.msra.mxu0 0
      %1381 = vmatprep.mubr.bf16.mxu0 0
      %1382 = vmatmul.mubr.bf16.gmra.mrb[0].mxu0 %v1291
      %v1383 = vpop.f32.mrb[0].mxu0
      %v1384 = vadd.f32 %v1331, %v1383
      %v1385 = vpop.f32.mrb[0].mxu0
      %v1386 = vadd.f32 %v1333, %v1385
      %v1387 = vpop.f32.mrb[0].mxu0
      %v1388 = vadd.f32 %v1335, %v1387
      %v1389 = vpop.f32.mrb[0].mxu0
      %v1390 = vadd.f32 %v1337, %v1389
      %1391 = vmatprep.mubr.bf16.mxu0 0
      %1392 = vmatmul.mubr.bf16.gmra.mrb[0].mxu0 %v1294
      %v1393 = vpop.f32.mrb[0].mxu0
      %v1394 = vadd.f32 %v1341, %v1393
      %v1395 = vpop.f32.mrb[0].mxu0
      %v1396 = vadd.f32 %v1343, %v1395
      %v1397 = vpop.f32.mrb[0].mxu0
      %v1398 = vadd.f32 %v1345, %v1397
      %v1399 = vpop.f32.mrb[0].mxu0
      %v1400 = vadd.f32 %v1347, %v1399
      %1401 = vdwg.mxu0
      %v1402 = vld [vmem:[%s5] sm:$0xff]
      %v1403 = vld [vmem:[%s5 + $0x8] sm:$0xff]
      %v1404 = vld [vmem:[%s5 + $0x10] sm:$0xff]
      %v1405 = vld [vmem:[%s5 + $0x18] sm:$0xff]
      %1407 = vset.pattern.permute.xlu0 0
      %1408 = vperm.xlu0 %1407, %v1402
      %v1409 = vpop.permute.xlu0 %1408
      %1412 = vset.pattern.permute.xlu0 0
      %1413 = vperm.xlu0 %1412, %v1403
      %v1414 = vpop.permute.xlu0 %1413
      %1417 = vset.pattern.permute.xlu0 0
      %1418 = vperm.xlu0 %1417, %v1404
      %v1419 = vpop.permute.xlu0 %1418
      %1422 = vset.pattern.permute.xlu0 0
      %1423 = vperm.xlu0 %1422, %v1405
      %v1424 = vpop.permute.xlu0 %1423
      %v1426 = vmul.f32 %v1384, %v1409
      %v1427 = vmul.f32 %v1386, %v1409
      %v1428 = vmul.f32 %v1388, %v1414
      %v1429 = vmul.f32 %v1390, %v1414
      %v1430 = vmul.f32 %v1394, %v1419
      %v1431 = vmul.f32 %v1396, %v1419
      %v1432 = vmul.f32 %v1398, %v1424
      %v1433 = vmul.f32 %v1400, %v1424
      %v1434 = vld [vmem:[%s6] sm:$0xff]
      %v1435 = vld [vmem:[%s6 + $0x8] sm:$0xff]
      %v1436 = vld [vmem:[%s6 + $0x10] sm:$0xff]
      %v1437 = vld [vmem:[%s6 + $0x18] sm:$0xff]
      %1439 = vset.pattern.permute.xlu0 0
      %1440 = vperm.xlu0 %1439, %v1434
      %v1441 = vpop.permute.xlu0 %1440
      %1444 = vset.pattern.permute.xlu0 0
      %1445 = vperm.xlu0 %1444, %v1435
      %v1446 = vpop.permute.xlu0 %1445
      %1449 = vset.pattern.permute.xlu0 0
      %1450 = vperm.xlu0 %1449, %v1436
      %v1451 = vpop.permute.xlu0 %1450
      %1454 = vset.pattern.permute.xlu0 0
      %1455 = vperm.xlu0 %1454, %v1437
      %v1456 = vpop.permute.xlu0 %1455
      %v1458 = vadd.f32 %v1426, %v1441
      %v1459 = vadd.f32 %v1427, %v1441
      %v1460 = vadd.f32 %v1428, %v1446
      %v1461 = vadd.f32 %v1429, %v1446
      %v1462 = vadd.f32 %v1430, %v1451
      %v1463 = vadd.f32 %v1431, %v1451
      %v1464 = vadd.f32 %v1432, %v1456
      %v1465 = vadd.f32 %v1433, %v1456
      %v1466 = vmax.f32 %v1458, 0.0
      %v1467 = vmax.f32 %v1459, 0.0
      %v1468 = vmax.f32 %v1460, 0.0
      %v1469 = vmax.f32 %v1461, 0.0
      %v1470 = vmax.f32 %v1462, 0.0
      %v1471 = vmax.f32 %v1463, 0.0
      %v1472 = vmax.f32 %v1464, 0.0
      %v1473 = vmax.f32 %v1465, 0.0
      %v1474 = vpack.c.bf16 %v1468, %v1466
      %v1475 = vpack.c.bf16 %v1469, %v1467
      %v1476 = vpack.c.bf16 %v1472, %v1470
      %v1477 = vpack.c.bf16 %v1473, %v1471
      %1482 = vrot.lane.b32.xlu0 %v1474, 17
      %v1483 = vpop.permute.xlu0 %1482
      %1484 = vrot.lane.b32.xlu0 %v1475, 17
      %v1485 = vpop.permute.xlu0 %1484
      %1486 = vrot.lane.b32.xlu0 %v1476, 17
      %v1487 = vpop.permute.xlu0 %1486
      %1488 = vrot.lane.b32.xlu0 %v1477, 17
      %v1489 = vpop.permute.xlu0 %1488
      %v1490 = vsel %vm761, %v1483, %v1485
      %v1491 = vsel %vm761, %v1487, %v1489
      %1498 = vst.msk [vmem:[#allocation3] sm:$0xff] %vm770, %v1483
      %1499 = vst [vmem:[#allocation3 + $0x8] sm:$0xff] %v1490
      %1500 = vst.msk [vmem:[#allocation3 + $0x10] sm:$0xff] %vm575, %v1485
      %1501 = vst.msk [vmem:[#allocation3 + $0x18] sm:$0xff] %vm770, %v1487
      %1502 = vst [vmem:[#allocation3 + $0x20] sm:$0xff] %v1491
      %1503 = vst.msk [vmem:[#allocation3 + $0x28] sm:$0xff] %vm575, %v1489
      %v1504 = vld [vmem:[#allocation3] sm:$0xff]
      %v1505 = vld [vmem:[#allocation3 + $0x8] sm:$0xff]
      %v1506 = vld [vmem:[#allocation3 + $0x18] sm:$0xff]
      %v1507 = vld [vmem:[#allocation3 + $0x20] sm:$0xff]
      %v1508 = vmul.bf16 %v1504, %v810
      %v1509 = vmul.bf16 %v1505, %v817
      %v1510 = vmul.bf16 %v1506, %v810
      %v1511 = vmul.bf16 %v1507, %v817
      %1512 = vst [vmem:[#allocation4] sm:$0xff] %v1508
      %1513 = vst [vmem:[#allocation4 + $0x8] sm:$0xff] %v1509
      %1514 = vst [vmem:[#allocation4 + $0x10] sm:$0xff] %v1510
      %1515 = vst [vmem:[#allocation4 + $0x18] sm:$0xff] %v1511
      %v1516 = vld [vmem:[#allocation3] sm:$0xff]
      %v1517 = vld [vmem:[#allocation3 + $0x8] sm:$0xff]
      %v1518 = vld [vmem:[#allocation3 + $0x10] sm:$0xff]
      %v1519 = vld [vmem:[#allocation3 + $0x18] sm:$0xff]
      %v1520 = vld [vmem:[#allocation3 + $0x20] sm:$0xff]
      %v1521 = vld [vmem:[#allocation3 + $0x28] sm:$0xff]
      %1528 = vrot.lane.b32.xlu0 %v1516, 127
      %v1529 = vpop.permute.xlu0 %1528
      %1530 = vrot.lane.b32.xlu0 %v1517, 127
      %v1531 = vpop.permute.xlu0 %1530
      %1532 = vrot.lane.b32.xlu0 %v1518, 127
      %v1533 = vpop.permute.xlu0 %1532
      %1534 = vrot.lane.b32.xlu0 %v1519, 127
      %v1535 = vpop.permute.xlu0 %1534
      %1536 = vrot.lane.b32.xlu0 %v1520, 127
      %v1537 = vpop.permute.xlu0 %1536
      %1538 = vrot.lane.b32.xlu0 %v1521, 127
      %v1539 = vpop.permute.xlu0 %1538
      %v1540 = vsel %vm850, %v1529, %v1531
      %v1541 = vsel %vm850, %v1531, %v1533
      %v1542 = vsel %vm850, %v1535, %v1537
      %v1543 = vsel %vm850, %v1537, %v1539
      %1548 = vst [vmem:[#allocation4 + $0x20] sm:$0xff] %v1540
      %1549 = vst [vmem:[#allocation4 + $0x28] sm:$0xff] %v1541
      %1550 = vst [vmem:[#allocation4 + $0x30] sm:$0xff] %v1542
      %1551 = vst [vmem:[#allocation4 + $0x38] sm:$0xff] %v1543
      %v1552 = vld [vmem:[#allocation3] sm:$0xff]
      %v1553 = vld [vmem:[#allocation3 + $0x8] sm:$0xff]
      %v1554 = vld [vmem:[#allocation3 + $0x10] sm:$0xff]
      %v1555 = vld [vmem:[#allocation3 + $0x18] sm:$0xff]
      %v1556 = vld [vmem:[#allocation3 + $0x20] sm:$0xff]
      %v1557 = vld [vmem:[#allocation3 + $0x28] sm:$0xff]
      %v1558 = vmul.bf16 %v1552, %v886
      %v1559 = vmul.bf16 %v1553, %v890
      %v1560 = vmul.bf16 %v1554, %v888
      %v1561 = vmul.bf16 %v1555, %v886
      %v1562 = vmul.bf16 %v1556, %v890
      %v1563 = vmul.bf16 %v1557, %v888
      %1570 = vrot.lane.b32.xlu0 %v1558, 126
      %v1571 = vpop.permute.xlu0 %1570
      %1572 = vrot.lane.b32.xlu0 %v1559, 126
      %v1573 = vpop.permute.xlu0 %1572
      %1574 = vrot.lane.b32.xlu0 %v1560, 126
      %v1575 = vpop.permute.xlu0 %1574
      %1576 = vrot.lane.b32.xlu0 %v1561, 126
      %v1577 = vpop.permute.xlu0 %1576
      %1578 = vrot.lane.b32.xlu0 %v1562, 126
      %v1579 = vpop.permute.xlu0 %1578
      %1580 = vrot.lane.b32.xlu0 %v1563, 126
      %v1581 = vpop.permute.xlu0 %1580
      %v1582 = vsel %vm918, %v1571, %v1573
      %v1583 = vsel %vm918, %v1573, %v1575
      %v1584 = vsel %vm918, %v1577, %v1579
      %v1585 = vsel %vm918, %v1579, %v1581
      %1590 = vst [vmem:[#allocation4 + $0x40] sm:$0xff] %v1582
      %1591 = vst [vmem:[#allocation4 + $0x48] sm:$0xff] %v1583
      %1592 = vst [vmem:[#allocation4 + $0x50] sm:$0xff] %v1584
      %1593 = vst [vmem:[#allocation4 + $0x58] sm:$0xff] %v1585
      %v1594 = vld [vmem:[#allocation3] sm:$0xff]
      %v1595 = vld [vmem:[#allocation3 + $0x8] sm:$0xff]
      %v1596 = vld [vmem:[#allocation3 + $0x10] sm:$0xff]
      %v1597 = vld [vmem:[#allocation3 + $0x18] sm:$0xff]
      %v1598 = vld [vmem:[#allocation3 + $0x20] sm:$0xff]
      %v1599 = vld [vmem:[#allocation3 + $0x28] sm:$0xff]
      %v1600 = vmul.bf16 %v1594, %v940
      %v1601 = vmul.bf16 %v1595, %v944
      %v1602 = vmul.bf16 %v1596, %v942
      %v1603 = vmul.bf16 %v1597, %v940
      %v1604 = vmul.bf16 %v1598, %v944
      %v1605 = vmul.bf16 %v1599, %v942
      %1612 = vrot.lane.b32.xlu0 %v1600, 112
      %v1613 = vpop.permute.xlu0 %1612
      %1614 = vrot.lane.b32.xlu0 %v1601, 112
      %v1615 = vpop.permute.xlu0 %1614
      %1616 = vrot.lane.b32.xlu0 %v1602, 112
      %v1617 = vpop.permute.xlu0 %1616
      %1618 = vrot.lane.b32.xlu0 %v1603, 112
      %v1619 = vpop.permute.xlu0 %1618
      %1620 = vrot.lane.b32.xlu0 %v1604, 112
      %v1621 = vpop.permute.xlu0 %1620
      %1622 = vrot.lane.b32.xlu0 %v1605, 112
      %v1623 = vpop.permute.xlu0 %1622
      %v1624 = vsel %vm972, %v1613, %v1615
      %v1625 = vsel %vm972, %v1615, %v1617
      %v1626 = vsel %vm972, %v1619, %v1621
      %v1627 = vsel %vm972, %v1621, %v1623
      %1632 = vst [vmem:[#allocation4 + $0x60] sm:$0xff] %v1624
      %1633 = vst [vmem:[#allocation4 + $0x68] sm:$0xff] %v1625
      %1634 = vst [vmem:[#allocation4 + $0x70] sm:$0xff] %v1626
      %1635 = vst [vmem:[#allocation4 + $0x78] sm:$0xff] %v1627
      %v1636 = vld [vmem:[#allocation3] sm:$0xff]
      %v1637 = vld [vmem:[#allocation3 + $0x8] sm:$0xff]
      %v1638 = vld [vmem:[#allocation3 + $0x10] sm:$0xff]
      %v1639 = vld [vmem:[#allocation3 + $0x18] sm:$0xff]
      %v1640 = vld [vmem:[#allocation3 + $0x20] sm:$0xff]
      %v1641 = vld [vmem:[#allocation3 + $0x28] sm:$0xff]
      %1648 = vrot.lane.b32.xlu0 %v1636, 111
      %v1649 = vpop.permute.xlu0 %1648
      %1650 = vrot.lane.b32.xlu0 %v1637, 111
      %v1651 = vpop.permute.xlu0 %1650
      %1652 = vrot.lane.b32.xlu0 %v1638, 111
      %v1653 = vpop.permute.xlu0 %1652
      %1654 = vrot.lane.b32.xlu0 %v1639, 111
      %v1655 = vpop.permute.xlu0 %1654
      %1656 = vrot.lane.b32.xlu0 %v1640, 111
      %v1657 = vpop.permute.xlu0 %1656
      %1658 = vrot.lane.b32.xlu0 %v1641, 111
      %v1659 = vpop.permute.xlu0 %1658
      %v1660 = vsel %vm1009, %v1649, %v1651
      %v1661 = vsel %vm1009, %v1651, %v1653
      %v1662 = vsel %vm1009, %v1655, %v1657
      %v1663 = vsel %vm1009, %v1657, %v1659
      %1668 = vst [vmem:[#allocation4 + $0x80] sm:$0xff] %v1660
      %1669 = vst [vmem:[#allocation4 + $0x88] sm:$0xff] %v1661
      %1670 = vst [vmem:[#allocation4 + $0x90] sm:$0xff] %v1662
      %1671 = vst [vmem:[#allocation4 + $0x98] sm:$0xff] %v1663
      %v1672 = vld [vmem:[#allocation3] sm:$0xff]
      %v1673 = vld [vmem:[#allocation3 + $0x8] sm:$0xff]
      %v1674 = vld [vmem:[#allocation3 + $0x10] sm:$0xff]
      %v1675 = vld [vmem:[#allocation3 + $0x18] sm:$0xff]
      %v1676 = vld [vmem:[#allocation3 + $0x20] sm:$0xff]
      %v1677 = vld [vmem:[#allocation3 + $0x28] sm:$0xff]
      %v1678 = vmul.bf16 %v1672, %v1029
      %v1679 = vmul.bf16 %v1673, %v1033
      %v1680 = vmul.bf16 %v1674, %v1031
      %v1681 = vmul.bf16 %v1675, %v1029
      %v1682 = vmul.bf16 %v1676, %v1033
      %v1683 = vmul.bf16 %v1677, %v1031
      %1690 = vrot.lane.b32.xlu0 %v1678, 110
      %v1691 = vpop.permute.xlu0 %1690
      %1692 = vrot.lane.b32.xlu0 %v1679, 110
      %v1693 = vpop.permute.xlu0 %1692
      %1694 = vrot.lane.b32.xlu0 %v1680, 110
      %v1695 = vpop.permute.xlu0 %1694
      %1696 = vrot.lane.b32.xlu0 %v1681, 110
      %v1697 = vpop.permute.xlu0 %1696
      %1698 = vrot.lane.b32.xlu0 %v1682, 110
      %v1699 = vpop.permute.xlu0 %1698
      %1700 = vrot.lane.b32.xlu0 %v1683, 110
      %v1701 = vpop.permute.xlu0 %1700
      %v1702 = vsel %vm1061, %v1691, %v1693
      %v1703 = vsel %vm1061, %v1693, %v1695
      %v1704 = vsel %vm1061, %v1697, %v1699
      %v1705 = vsel %vm1061, %v1699, %v1701
      %1710 = vst [vmem:[#allocation4 + $0xa0] sm:$0xff] %v1702
      %1711 = vst [vmem:[#allocation4 + $0xa8] sm:$0xff] %v1703
      %1712 = vst [vmem:[#allocation4 + $0xb0] sm:$0xff] %v1704
      %1713 = vst [vmem:[#allocation4 + $0xb8] sm:$0xff] %v1705
      %v1714 = vld [vmem:[#allocation3] sm:$0xff]
      %v1715 = vld [vmem:[#allocation3 + $0x8] sm:$0xff]
      %v1716 = vld [vmem:[#allocation3 + $0x10] sm:$0xff]
      %v1717 = vld [vmem:[#allocation3 + $0x18] sm:$0xff]
      %v1718 = vld [vmem:[#allocation3 + $0x20] sm:$0xff]
      %v1719 = vld [vmem:[#allocation3 + $0x28] sm:$0xff]
      %v1720 = vmul.bf16 %v1714, %v1081
      %v1721 = vmul.bf16 %v1715, %v1085
      %v1722 = vmul.bf16 %v1716, %v1083
      %v1723 = vmul.bf16 %v1717, %v1081
      %v1724 = vmul.bf16 %v1718, %v1085
      %v1725 = vmul.bf16 %v1719, %v1083
      %1732 = vrot.lane.b32.xlu0 %v1720, 96
      %v1733 = vpop.permute.xlu0 %1732
      %1734 = vrot.lane.b32.xlu0 %v1721, 96
      %v1735 = vpop.permute.xlu0 %1734
      %1736 = vrot.lane.b32.xlu0 %v1722, 96
      %v1737 = vpop.permute.xlu0 %1736
      %1738 = vrot.lane.b32.xlu0 %v1723, 96
      %v1739 = vpop.permute.xlu0 %1738
      %1740 = vrot.lane.b32.xlu0 %v1724, 96
      %v1741 = vpop.permute.xlu0 %1740
      %1742 = vrot.lane.b32.xlu0 %v1725, 96
      %v1743 = vpop.permute.xlu0 %1742
      %v1744 = vsel %vm1113, %v1733, %v1735
      %v1745 = vsel %vm1113, %v1735, %v1737
      %v1746 = vsel %vm1113, %v1739, %v1741
      %v1747 = vsel %vm1113, %v1741, %v1743
      %1752 = vst [vmem:[#allocation4 + $0xc0] sm:$0xff] %v1744
      %1753 = vst [vmem:[#allocation4 + $0xc8] sm:$0xff] %v1745
      %1754 = vst [vmem:[#allocation4 + $0xd0] sm:$0xff] %v1746
      %1755 = vst [vmem:[#allocation4 + $0xd8] sm:$0xff] %v1747
      %v1756 = vld [vmem:[#allocation3] sm:$0xff]
      %v1757 = vld [vmem:[#allocation3 + $0x8] sm:$0xff]
      %v1758 = vld [vmem:[#allocation3 + $0x10] sm:$0xff]
      %v1759 = vld [vmem:[#allocation3 + $0x18] sm:$0xff]
      %v1760 = vld [vmem:[#allocation3 + $0x20] sm:$0xff]
      %v1761 = vld [vmem:[#allocation3 + $0x28] sm:$0xff]
      %1768 = vrot.lane.b32.xlu0 %v1756, 95
      %v1769 = vpop.permute.xlu0 %1768
      %1770 = vrot.lane.b32.xlu0 %v1757, 95
      %v1771 = vpop.permute.xlu0 %1770
      %1772 = vrot.lane.b32.xlu0 %v1758, 95
      %v1773 = vpop.permute.xlu0 %1772
      %1774 = vrot.lane.b32.xlu0 %v1759, 95
      %v1775 = vpop.permute.xlu0 %1774
      %1776 = vrot.lane.b32.xlu0 %v1760, 95
      %v1777 = vpop.permute.xlu0 %1776
      %1778 = vrot.lane.b32.xlu0 %v1761, 95
      %v1779 = vpop.permute.xlu0 %1778
      %v1780 = vsel %vm1150, %v1769, %v1771
      %v1781 = vsel %vm1150, %v1771, %v1773
      %v1782 = vsel %vm1150, %v1775, %v1777
      %v1783 = vsel %vm1150, %v1777, %v1779
      %1788 = vst [vmem:[#allocation4 + $0xe0] sm:$0xff] %v1780
      %1789 = vst [vmem:[#allocation4 + $0xe8] sm:$0xff] %v1781
      %1790 = vst [vmem:[#allocation4 + $0xf0] sm:$0xff] %v1782
      %1791 = vst [vmem:[#allocation4 + $0xf8] sm:$0xff] %v1783
      %v1792 = vld [vmem:[#allocation3] sm:$0xff]
      %v1793 = vld [vmem:[#allocation3 + $0x8] sm:$0xff]
      %v1794 = vld [vmem:[#allocation3 + $0x10] sm:$0xff]
      %v1795 = vld [vmem:[#allocation3 + $0x18] sm:$0xff]
      %v1796 = vld [vmem:[#allocation3 + $0x20] sm:$0xff]
      %v1797 = vld [vmem:[#allocation3 + $0x28] sm:$0xff]
      %v1798 = vmul.bf16 %v1792, %v1170
      %v1799 = vmul.bf16 %v1793, %v1174
      %v1800 = vmul.bf16 %v1794, %v1172
      %v1801 = vmul.bf16 %v1795, %v1170
      %v1802 = vmul.bf16 %v1796, %v1174
      %v1803 = vmul.bf16 %v1797, %v1172
      %1810 = vrot.lane.b32.xlu0 %v1798, 94
      %v1811 = vpop.permute.xlu0 %1810
      %1812 = vrot.lane.b32.xlu0 %v1799, 94
      %v1813 = vpop.permute.xlu0 %1812
      %1814 = vrot.lane.b32.xlu0 %v1800, 94
      %v1815 = vpop.permute.xlu0 %1814
      %1816 = vrot.lane.b32.xlu0 %v1801, 94
      %v1817 = vpop.permute.xlu0 %1816
      %1818 = vrot.lane.b32.xlu0 %v1802, 94
      %v1819 = vpop.permute.xlu0 %1818
      %1820 = vrot.lane.b32.xlu0 %v1803, 94
      %v1821 = vpop.permute.xlu0 %1820
      %v1822 = vsel %vm1202, %v1811, %v1813
      %v1823 = vsel %vm1202, %v1813, %v1815
      %v1824 = vsel %vm1202, %v1817, %v1819
      %v1825 = vsel %vm1202, %v1819, %v1821
      %1830 = vst [vmem:[#allocation4 + $0x100] sm:$0xff] %v1822
      %1831 = vst [vmem:[#allocation4 + $0x108] sm:$0xff] %v1823
      %1832 = vst [vmem:[#allocation4 + $0x110] sm:$0xff] %v1824
      %1833 = vst [vmem:[#allocation4 + $0x118] sm:$0xff] %v1825
      %v1834 = vld [vmem:[%s7] sm:$0xff]
      %v1835 = vld [vmem:[%s7 + $0x8] sm:$0xf]
      %v1836 = vld [vmem:[%s7 + $0xc] sm:$0xff]
      %v1837 = vld [vmem:[%s7 + $0x14] sm:$0xf]
      %v1838 = vld [vmem:[%s7 + $0x18] sm:$0xff]
      %v1839 = vld [vmem:[%s7 + $0x20] sm:$0xf]
      %v1840 = vld [vmem:[%s7 + $0x24] sm:$0xff]
      %v1841 = vld [vmem:[%s7 + $0x2c] sm:$0xf]
      %v1842 = vld [vmem:[#allocation4] sm:$0xff]
      %v1843 = vld [vmem:[#allocation4 + $0x8] sm:$0xff]
      %v1844 = vld [vmem:[#allocation4 + $0x10] sm:$0xff]
      %v1845 = vld [vmem:[#allocation4 + $0x18] sm:$0xff]
      %v1846 = vld [vmem:[#allocation4 + $0x20] sm:$0xff]
      %v1847 = vld [vmem:[#allocation4 + $0x28] sm:$0xff]
      %v1848 = vld [vmem:[#allocation4 + $0x30] sm:$0xff]
      %v1849 = vld [vmem:[#allocation4 + $0x38] sm:$0xff]
      %v1850 = vld [vmem:[#allocation4 + $0x40] sm:$0xff]
      %v1851 = vld [vmem:[#allocation4 + $0x48] sm:$0xff]
      %v1852 = vld [vmem:[#allocation4 + $0x50] sm:$0xff]
      %v1853 = vld [vmem:[#allocation4 + $0x58] sm:$0xff]
      %v1854 = vld [vmem:[#allocation4 + $0x60] sm:$0xff]
      %v1855 = vld [vmem:[#allocation4 + $0x68] sm:$0xff]
      %v1856 = vld [vmem:[#allocation4 + $0x70] sm:$0xff]
      %v1857 = vld [vmem:[#allocation4 + $0x78] sm:$0xff]
      %v1858 = vld [vmem:[#allocation4 + $0x80] sm:$0xff]
      %v1859 = vld [vmem:[#allocation4 + $0x88] sm:$0xff]
      %v1860 = vld [vmem:[#allocation4 + $0x90] sm:$0xff]
      %v1861 = vld [vmem:[#allocation4 + $0x98] sm:$0xff]
      %v1862 = vld [vmem:[#allocation4 + $0xa0] sm:$0xff]
      %v1863 = vld [vmem:[#allocation4 + $0xa8] sm:$0xff]
      %v1864 = vld [vmem:[#allocation4 + $0xb0] sm:$0xff]
      %v1865 = vld [vmem:[#allocation4 + $0xb8] sm:$0xff]
      %v1866 = vld [vmem:[#allocation4 + $0xc0] sm:$0xff]
      %v1867 = vld [vmem:[#allocation4 + $0xc8] sm:$0xff]
      %v1868 = vld [vmem:[#allocation4 + $0xd0] sm:$0xff]
      %v1869 = vld [vmem:[#allocation4 + $0xd8] sm:$0xff]
      %v1870 = vld [vmem:[#allocation4 + $0xe0] sm:$0xff]
      %v1871 = vld [vmem:[#allocation4 + $0xe8] sm:$0xff]
      %v1872 = vld [vmem:[#allocation4 + $0xf0] sm:$0xff]
      %v1873 = vld [vmem:[#allocation4 + $0xf8] sm:$0xff]
      %v1874 = vld [vmem:[#allocation4 + $0x100] sm:$0xff]
      %v1875 = vld [vmem:[#allocation4 + $0x108] sm:$0xff]
      %v1876 = vld [vmem:[#allocation4 + $0x110] sm:$0xff]
      %v1877 = vld [vmem:[#allocation4 + $0x118] sm:$0xff]
      %v1886 = vunpack.c.l.b16 %v1834
      %v1887 = vunpack.c.h.b16 %v1834
      %v1888 = vunpack.c.l.b16 %v1835
      %v1889 = vunpack.c.l.b16 %v1836
      %v1890 = vunpack.c.h.b16 %v1836
      %v1891 = vunpack.c.l.b16 %v1837
      %v1892 = vunpack.c.l.b16 %v1838
      %v1893 = vunpack.c.h.b16 %v1838
      %v1894 = vunpack.c.l.b16 %v1839
      %v1895 = vunpack.c.l.b16 %v1840
      %v1896 = vunpack.c.h.b16 %v1840
      %v1897 = vunpack.c.l.b16 %v1841
      %v1898 = vpack.c.b16 %v1889, %v1886
      %v1899 = vpack.c.b16 %v1890, %v1887
      %v1900 = vpack.c.b16 %v1891, %v1888
      %v1901 = vpack.c.b16 %v1895, %v1892
      %v1902 = vpack.c.b16 %v1896, %v1893
      %v1903 = vpack.c.b16 %v1897, %v1894
      %v1909 = vsel %vm1289, %v1900, 0
      %v1912 = vsel %vm1289, %v1903, 0
      %1914 = vmatprep.subr.bf16.mxu0 %v1843
      %1915 = vmatpush1.bf16.msra.mxu0 %v1842
      %1916 = vmatprep.subr.bf16.mxu0 %v1845
      %1917 = vmatpush1.bf16.msra.mxu0 %v1844
      %1918 = vmatprep.subr.bf16.mxu0 %v1847
      %1919 = vmatpush1.bf16.msra.mxu0 %v1846
      %1920 = vmatprep.subr.bf16.mxu0 %v1849
      %1921 = vmatpush1.bf16.msra.mxu0 %v1848
      %1922 = vmatprep.subr.bf16.mxu0 %v1851
      %1923 = vmatpush1.bf16.msra.mxu0 %v1850
      %1924 = vmatprep.subr.bf16.mxu0 %v1853
      %1925 = vmatpush1.bf16.msra.mxu0 %v1852
      %1926 = vmatprep.subr.bf16.mxu0 %v1855
      %1927 = vmatpush1.bf16.msra.mxu0 %v1854
      %1928 = vmatprep.subr.bf16.mxu0 %v1857
      %1929 = vmatpush1.bf16.msra.mxu0 %v1856
      %1930 = vmatprep.subr.bf16.mxu0 %v1859
      %1931 = vmatpush1.bf16.msra.mxu0 %v1858
      %1932 = vmatprep.subr.bf16.mxu0 %v1861
      %1933 = vmatpush1.bf16.msra.mxu0 %v1860
      %1934 = vmatprep.subr.bf16.mxu0 %v1863
      %1935 = vmatpush1.bf16.msra.mxu0 %v1862
      %1936 = vmatprep.subr.bf16.mxu0 %v1865
      %1937 = vmatpush1.bf16.msra.mxu0 %v1864
      %1938 = vmatprep.subr.bf16.mxu0 %v1867
      %1939 = vmatpush1.bf16.msra.mxu0 %v1866
      %1940 = vmatprep.subr.bf16.mxu0 %v1869
      %1941 = vmatpush1.bf16.msra.mxu0 %v1868
      %1942 = vmatprep.subr.bf16.mxu0 %v1871
      %1943 = vmatpush1.bf16.msra.mxu0 %v1870
      %1944 = vmatprep.subr.bf16.mxu0 %v1873
      %1945 = vmatpush1.bf16.msra.mxu0 %v1872
      %1946 = vmatprep.mubr.bf16.mxu0 %v1899
      %1947 = vmatmul.mubr.bf16.gmra.mrb[0].mxu0 %v1898
      %v1948 = vpop.f32.mrb[0].mxu0
      %v1949 = vadd.f32 0.0, %v1948
      %v1950 = vpop.f32.mrb[0].mxu0
      %v1951 = vadd.f32 0.0, %v1950
      %v1952 = vpop.f32.mrb[0].mxu0
      %v1953 = vadd.f32 0.0, %v1952
      %v1954 = vpop.f32.mrb[0].mxu0
      %v1955 = vadd.f32 0.0, %v1954
      %1956 = vmatprep.mubr.bf16.mxu0 %v1902
      %1957 = vmatmul.mubr.bf16.gmra.mrb[0].mxu0 %v1901
      %v1958 = vpop.f32.mrb[0].mxu0
      %v1959 = vadd.f32 0.0, %v1958
      %v1960 = vpop.f32.mrb[0].mxu0
      %v1961 = vadd.f32 0.0, %v1960
      %v1962 = vpop.f32.mrb[0].mxu0
      %v1963 = vadd.f32 0.0, %v1962
      %v1964 = vpop.f32.mrb[0].mxu0
      %v1965 = vadd.f32 0.0, %v1964
      %1966 = vdwg.mxu0
      %1967 = vmatprep.subr.bf16.mxu0 %v1875
      %1968 = vmatpush1.bf16.msra.mxu0 %v1874
      %1969 = vmatprep.subr.bf16.mxu0 %v1877
      %1970 = vmatpush1.bf16.msra.mxu0 %v1876
      %1971 = vmatprep.subr.bf16.mxu0 0
      %1972 = vmatpush1.bf16.msra.mxu0 0
      %1973 = vmatprep.subr.bf16.mxu0 0
      %1974 = vmatpush1.bf16.msra.mxu0 0
      %1975 = vmatprep.subr.bf16.mxu0 0
      %1976 = vmatpush1.bf16.msra.mxu0 0
      %1977 = vmatprep.subr.bf16.mxu0 0
      %1978 = vmatpush1.bf16.msra.mxu0 0
      %1979 = vmatprep.subr.bf16.mxu0 0
      %1980 = vmatpush1.bf16.msra.mxu0 0
      %1981 = vmatprep.subr.bf16.mxu0 0
      %1982 = vmatpush1.bf16.msra.mxu0 0
      %1983 = vmatprep.subr.bf16.mxu0 0
      %1984 = vmatpush1.bf16.msra.mxu0 0
      %1985 = vmatprep.subr.bf16.mxu0 0
      %1986 = vmatpush1.bf16.msra.mxu0 0
      %1987 = vmatprep.subr.bf16.mxu0 0
      %1988 = vmatpush1.bf16.msra.mxu0 0
      %1989 = vmatprep.subr.bf16.mxu0 0
      %1990 = vmatpush1.bf16.msra.mxu0 0
      %1991 = vmatprep.subr.bf16.mxu0 0
      %1992 = vmatpush1.bf16.msra.mxu0 0
      %1993 = vmatprep.subr.bf16.mxu0 0
      %1994 = vmatpush1.bf16.msra.mxu0 0
      %1995 = vmatprep.subr.bf16.mxu0 0
      %1996 = vmatpush1.bf16.msra.mxu0 0
      %1997 = vmatprep.subr.bf16.mxu0 0
      %1998 = vmatpush1.bf16.msra.mxu0 0
      %1999 = vmatprep.mubr.bf16.mxu0 0
      %2000 = vmatmul.mubr.bf16.gmra.mrb[0].mxu0 %v1909
      %v2001 = vpop.f32.mrb[0].mxu0
      %v2002 = vadd.f32 %v1949, %v2001
      %v2003 = vpop.f32.mrb[0].mxu0
      %v2004 = vadd.f32 %v1951, %v2003
      %v2005 = vpop.f32.mrb[0].mxu0
      %v2006 = vadd.f32 %v1953, %v2005
      %v2007 = vpop.f32.mrb[0].mxu0
      %v2008 = vadd.f32 %v1955, %v2007
      %2009 = vmatprep.mubr.bf16.mxu0 0
      %2010 = vmatmul.mubr.bf16.gmra.mrb[0].mxu0 %v1912
      %v2011 = vpop.f32.mrb[0].mxu0
      %v2012 = vadd.f32 %v1959, %v2011
      %v2013 = vpop.f32.mrb[0].mxu0
      %v2014 = vadd.f32 %v1961, %v2013
      %v2015 = vpop.f32.mrb[0].mxu0
      %v2016 = vadd.f32 %v1963, %v2015
      %v2017 = vpop.f32.mrb[0].mxu0
      %v2018 = vadd.f32 %v1965, %v2017
      %2019 = vdwg.mxu0
      %v2020 = vld [vmem:[%s8] sm:$0xff]
      %v2021 = vld [vmem:[%s8 + $0x8] sm:$0xff]
      %v2022 = vld [vmem:[%s8 + $0x10] sm:$0xff]
      %v2023 = vld [vmem:[%s8 + $0x18] sm:$0xff]
      %2025 = vset.pattern.permute.xlu0 0
      %2026 = vperm.xlu0 %2025, %v2020
      %v2027 = vpop.permute.xlu0 %2026
      %2030 = vset.pattern.permute.xlu0 0
      %2031 = vperm.xlu0 %2030, %v2021
      %v2032 = vpop.permute.xlu0 %2031
      %2035 = vset.pattern.permute.xlu0 0
      %2036 = vperm.xlu0 %2035, %v2022
      %v2037 = vpop.permute.xlu0 %2036
      %2040 = vset.pattern.permute.xlu0 0
      %2041 = vperm.xlu0 %2040, %v2023
      %v2042 = vpop.permute.xlu0 %2041
      %v2044 = vmul.f32 %v2002, %v2027
      %v2045 = vmul.f32 %v2004, %v2027
      %v2046 = vmul.f32 %v2006, %v2032
      %v2047 = vmul.f32 %v2008, %v2032
      %v2048 = vmul.f32 %v2012, %v2037
      %v2049 = vmul.f32 %v2014, %v2037
      %v2050 = vmul.f32 %v2016, %v2042
      %v2051 = vmul.f32 %v2018, %v2042
      %v2052 = vld [vmem:[%s9] sm:$0xff]
      %v2053 = vld [vmem:[%s9 + $0x8] sm:$0xff]
      %v2054 = vld [vmem:[%s9 + $0x10] sm:$0xff]
      %v2055 = vld [vmem:[%s9 + $0x18] sm:$0xff]
      %2057 = vset.pattern.permute.xlu0 0
      %2058 = vperm.xlu0 %2057, %v2052
      %v2059 = vpop.permute.xlu0 %2058
      %2062 = vset.pattern.permute.xlu0 0
      %2063 = vperm.xlu0 %2062, %v2053
      %v2064 = vpop.permute.xlu0 %2063
      %2067 = vset.pattern.permute.xlu0 0
      %2068 = vperm.xlu0 %2067, %v2054
      %v2069 = vpop.permute.xlu0 %2068
      %2072 = vset.pattern.permute.xlu0 0
      %2073 = vperm.xlu0 %2072, %v2055
      %v2074 = vpop.permute.xlu0 %2073
      %v2076 = vadd.f32 %v2044, %v2059
      %v2077 = vadd.f32 %v2045, %v2059
      %v2078 = vadd.f32 %v2046, %v2064
      %v2079 = vadd.f32 %v2047, %v2064
      %v2080 = vadd.f32 %v2048, %v2069
      %v2081 = vadd.f32 %v2049, %v2069
      %v2082 = vadd.f32 %v2050, %v2074
      %v2083 = vadd.f32 %v2051, %v2074
      %v2084 = vld [vmem:[#allocation2] sm:$0xff]
      %v2085 = vld [vmem:[#allocation2 + $0x8] sm:$0xff]
      %v2086 = vld [vmem:[#allocation2 + $0x10] sm:$0xff]
      %v2087 = vld [vmem:[#allocation2 + $0x18] sm:$0xff]
      %v2088 = vld [vmem:[#allocation2 + $0x20] sm:$0xff]
      %v2089 = vld [vmem:[#allocation2 + $0x28] sm:$0xff]
      %v2090 = vld [vmem:[#allocation2 + $0x30] sm:$0xff]
      %v2091 = vld [vmem:[#allocation2 + $0x38] sm:$0xff]
      %v2092 = vadd.f32 %v2084, %v2076
      %v2093 = vadd.f32 %v2085, %v2077
      %v2094 = vadd.f32 %v2086, %v2078
      %v2095 = vadd.f32 %v2087, %v2079
      %v2096 = vadd.f32 %v2088, %v2080
      %v2097 = vadd.f32 %v2089, %v2081
      %v2098 = vadd.f32 %v2090, %v2082
      %v2099 = vadd.f32 %v2091, %v2083
      %v2100 = vmax.f32 %v2092, 0.0
      %v2101 = vmax.f32 %v2093, 0.0
      %v2102 = vmax.f32 %v2094, 0.0
      %v2103 = vmax.f32 %v2095, 0.0
      %v2104 = vmax.f32 %v2096, 0.0
      %v2105 = vmax.f32 %v2097, 0.0
      %v2106 = vmax.f32 %v2098, 0.0
      %v2107 = vmax.f32 %v2099, 0.0
      %2108 = vst [vmem:[%s563] sm:$0xff] %v2100
      %2109 = vst [vmem:[%s563 + $0x8] sm:$0xff] %v2101
      %2110 = vst [vmem:[%s563 + $0x10] sm:$0xff] %v2102
      %2111 = vst [vmem:[%s563 + $0x18] sm:$0xff] %v2103
      %2112 = vst [vmem:[%s563 + $0x20] sm:$0xff] %v2104
      %2113 = vst [vmem:[%s563 + $0x28] sm:$0xff] %v2105
      %2114 = vst [vmem:[%s563 + $0x30] sm:$0xff] %v2106
      %2115 = vst [vmem:[%s563 + $0x38] sm:$0xff] %v2107
      %v2116 = vpack.c.bf16 %v2102, %v2100
      %v2117 = vpack.c.bf16 %v2103, %v2101
      %v2118 = vpack.c.bf16 %v2106, %v2104
      %v2119 = vpack.c.bf16 %v2107, %v2105
      %v2120 = vld [vmem:[%s10] sm:$0xf]
      %v2121 = vld [vmem:[%s10 + $0x4] sm:$0xf]
      %v2122 = vld [vmem:[%s11] sm:$0xff]
      %v2123 = vld [vmem:[%s11 + $0x8] sm:$0xff]
      %2125 = vset.pattern.permute.xlu0 0
      %2126 = vperm.xlu0 %2125, %v2122
      %v2127 = vpop.permute.xlu0 %2126
      %2130 = vset.pattern.permute.xlu0 0
      %2131 = vperm.xlu0 %2130, %v2123
      %v2132 = vpop.permute.xlu0 %2131
      %v2136 = vunpack.c.l.b16 %v2120
      %v2137 = vunpack.c.l.b16 %v2121
      %v2138 = vpack.c.b16 %v2137, %v2136
      %v2140 = vsel %vm1289, %v2138, 0
      %2142 = vmatprep.subr.bf16.mxu0 %v2117
      %2143 = vmatpush1.bf16.msra.mxu0 %v2116
      %2144 = vmatprep.subr.bf16.mxu0 %v2119
      %2145 = vmatpush1.bf16.msra.mxu0 %v2118
      %2146 = vmatprep.subr.bf16.mxu0 0
      %2147 = vmatpush1.bf16.msra.mxu0 0
      %2148 = vmatprep.subr.bf16.mxu0 0
      %2149 = vmatpush1.bf16.msra.mxu0 0
      %2150 = vmatprep.subr.bf16.mxu0 0
      %2151 = vmatpush1.bf16.msra.mxu0 0
      %2152 = vmatprep.subr.bf16.mxu0 0
      %2153 = vmatpush1.bf16.msra.mxu0 0
      %2154 = vmatprep.subr.bf16.mxu0 0
      %2155 = vmatpush1.bf16.msra.mxu0 0
      %2156 = vmatprep.subr.bf16.mxu0 0
      %2157 = vmatpush1.bf16.msra.mxu0 0
      %2158 = vmatprep.subr.bf16.mxu0 0
      %2159 = vmatpush1.bf16.msra.mxu0 0
      %2160 = vmatprep.subr.bf16.mxu0 0
      %2161 = vmatpush1.bf16.msra.mxu0 0
      %2162 = vmatprep.subr.bf16.mxu0 0
      %2163 = vmatpush1.bf16.msra.mxu0 0
      %2164 = vmatprep.subr.bf16.mxu0 0
      %2165 = vmatpush1.bf16.msra.mxu0 0
      %2166 = vmatprep.subr.bf16.mxu0 0
      %2167 = vmatpush1.bf16.msra.mxu0 0
      %2168 = vmatprep.subr.bf16.mxu0 0
      %2169 = vmatpush1.bf16.msra.mxu0 0
      %2170 = vmatprep.subr.bf16.mxu0 0
      %2171 = vmatpush1.bf16.msra.mxu0 0
      %2172 = vmatprep.subr.bf16.mxu0 0
      %2173 = vmatpush1.bf16.msra.mxu0 0
      %2174 = vmatprep.mubr.bf16.mxu0 0
      %2175 = vmatmul.mubr.bf16.gmra.mrb[0].mxu0 %v2140
      %v2176 = vpop.f32.mrb[0].mxu0
      %v2177 = vadd.f32 %v2127, %v2176
      %v2178 = vpop.f32.mrb[0].mxu0
      %v2179 = vadd.f32 %v2127, %v2178
      %v2180 = vpop.f32.mrb[0].mxu0
      %v2181 = vadd.f32 %v2132, %v2180
      %v2182 = vpop.f32.mrb[0].mxu0
      %v2183 = vadd.f32 %v2132, %v2182
      %2184 = vdwg.mxu0
      %2185 = vst [vmem:[%s568] sm:$0xff] %v2177
      %2186 = vst [vmem:[%s568 + $0x8] sm:$0xff] %v2179
      %2187 = vst [vmem:[%s568 + $0x10] sm:$0xff] %v2181
      %2188 = vst [vmem:[%s568 + $0x18] sm:$0xff] %v2183
      %v2189 = vadd.f32 %v2100, %v2101
      %2190 = vadd.xlane.f32.xlu0 %v2189
      %v2191 = vpop.xlane.xlu0 %2190
      %v2192 = vadd.f32 %v2102, %v2103
      %2193 = vadd.xlane.f32.xlu0 %v2192
      %v2194 = vpop.xlane.xlu0 %2193
      %v2195 = vadd.f32 %v2104, %v2105
      %2196 = vadd.xlane.f32.xlu0 %v2195
      %v2197 = vpop.xlane.xlu0 %2196
      %v2198 = vadd.f32 %v2106, %v2107
      %2199 = vadd.xlane.f32.xlu0 %v2198
      %v2200 = vpop.xlane.xlu0 %2199
      %v2201 = vmul.f32 %v2191, 0.00390625
      %v2202 = vmul.f32 %v2194, 0.00390625
      %v2203 = vmul.f32 %v2197, 0.00390625
      %v2204 = vmul.f32 %v2200, 0.00390625
      %v2205 = vld [vmem:[%s12] sm:$0xff]
      %v2206 = vld [vmem:[%s12 + $0x8] sm:$0xff]
      %v2207 = vld [vmem:[%s13] sm:$0xff]
      %v2208 = vld [vmem:[%s13 + $0x8] sm:$0xff]
      %v2210 = vsel %vm1289, %v2205, 0
      %v2213 = vsel %vm1289, %v2206, 0
      %2215 = vmatprep.subr.mxu0 0.0
      %2216 = vmatpush1.msra.mxu0 %v2201
      %2217 = vmatprep.subr.mxu0 0.0
      %2218 = vmatpush1.msra.mxu0 %v2202
      %2219 = vmatprep.subr.mxu0 0.0
      %2220 = vmatpush1.msra.mxu0 %v2203
      %2221 = vmatprep.subr.mxu0 0.0
      %2222 = vmatpush1.msra.mxu0 %v2204
      %2223 = vmatprep.subr.mxu0 0.0
      %2224 = vmatpush1.msra.mxu0 0.0
      %2225 = vmatprep.subr.mxu0 0.0
      %2226 = vmatpush1.msra.mxu0 0.0
      %2227 = vmatprep.subr.mxu0 0.0
      %2228 = vmatpush1.msra.mxu0 0.0
      %2229 = vmatprep.subr.mxu0 0.0
      %2230 = vmatpush1.msra.mxu0 0.0
      %2231 = vmatprep.subr.mxu0 0.0
      %2232 = vmatpush1.msra.mxu0 0.0
      %2233 = vmatprep.subr.mxu0 0.0
      %2234 = vmatpush1.msra.mxu0 0.0
      %2235 = vmatprep.subr.mxu0 0.0
      %2236 = vmatpush1.msra.mxu0 0.0
      %2237 = vmatprep.subr.mxu0 0.0
      %2238 = vmatpush1.msra.mxu0 0.0
      %2239 = vmatprep.subr.mxu0 0.0
      %2240 = vmatpush1.msra.mxu0 0.0
      %2241 = vmatprep.subr.mxu0 0.0
      %2242 = vmatpush1.msra.mxu0 0.0
      %2243 = vmatprep.subr.mxu0 0.0
      %2244 = vmatpush1.msra.mxu0 0.0
      %2245 = vmatprep.subr.mxu0 0.0
      %2246 = vmatpush1.msra.mxu0 0.0
      %2247 = vmatprep.subr.mxu0 0.0
      %2248 = vmatpush1.msra.mxu0 0.0
      %2249 = vmatprep.subr.mxu0 0.0
      %2250 = vmatpush1.msra.mxu0 0.0
      %2251 = vmatprep.subr.mxu0 0.0
      %2252 = vmatpush1.msra.mxu0 0.0
      %2253 = vmatprep.subr.mxu0 0.0
      %2254 = vmatpush1.msra.mxu0 0.0
      %2255 = vmatprep.subr.mxu0 0.0
      %2256 = vmatpush1.msra.mxu0 0.0
      %2257 = vmatprep.subr.mxu0 0.0
      %2258 = vmatpush1.msra.mxu0 0.0
      %2259 = vmatprep.subr.mxu0 0.0
      %2260 = vmatpush1.msra.mxu0 0.0
      %2261 = vmatprep.subr.mxu0 0.0
      %2262 = vmatpush1.msra.mxu0 0.0
      %2263 = vmatprep.subr.mxu0 0.0
      %2264 = vmatpush1.msra.mxu0 0.0
      %2265 = vmatprep.subr.mxu0 0.0
      %2266 = vmatpush1.msra.mxu0 0.0
      %2267 = vmatprep.subr.mxu0 0.0
      %2268 = vmatpush1.msra.mxu0 0.0
      %2269 = vmatprep.subr.mxu0 0.0
      %2270 = vmatpush1.msra.mxu0 0.0
      %2271 = vmatprep.subr.mxu0 0.0
      %2272 = vmatpush1.msra.mxu0 0.0
      %2273 = vmatprep.subr.mxu0 0.0
      %2274 = vmatpush1.msra.mxu0 0.0
      %2275 = vmatprep.subr.mxu0 0.0
      %2276 = vmatpush1.msra.mxu0 0.0
      %2277 = vmatprep.subr.mxu0 0.0
      %2278 = vmatpush1.msra.mxu0 0.0
      %2279 = vmatprep.mubr.f32.mxu0 0.0
      %2280 = vmatmul.mubr.f32.gmra.mrb[0].mxu0 %v2210
      %v2281 = vpop.f32.mrb[0].mxu0
      %v2282 = vadd.f32 %v2207, %v2281
      %v2283 = vpop.f32.mrb[0].mxu0
      %2284 = vmatprep.mubr.f32.mxu0 0.0
      %2285 = vmatmul.mubr.f32.gmra.mrb[0].mxu0 %v2213
      %v2286 = vpop.f32.mrb[0].mxu0
      %v2287 = vadd.f32 %v2208, %v2286
      %v2288 = vpop.f32.mrb[0].mxu0
      %2289 = vdwg.mxu0
      %vm2290 = vcmask 7168
      %v2291 = vsel %vm2290, %v2282, -inf
      %v2292 = vsel %vm2290, %v2287, -inf
      %v2293 = vmax.f32 %v2291, %v2292
      %v2294 = vrot.slane %v2293, 4
      %v2295 = vmax.f32 %v2293, %v2294
      %v2296 = vrot.slane %v2295, 2
      %v2297 = vmax.f32 %v2295, %v2296
      %v2298 = vrot.slane %v2297, 1
      %v2299 = vmax.f32 %v2297, %v2298
      %v2300 = vsub.f32 %v2282, %v2299
      %v2301 = vsub.f32 %v2287, %v2299
      %v2302 = vmul.f32 %v2300, 1.442695
      %v2303 = vpow.pop %v2302
      %v2304 = vmul.f32 %v2301, 1.442695
      %v2305 = vpow.pop %v2304
      %v2306 = vsel %vm2290, %v2303, 0.0
      %v2307 = vsel %vm2290, %v2305, 0.0
      %v2308 = vadd.f32 %v2306, %v2307
      %v2309 = vrot.slane %v2308, 4
      %v2310 = vadd.f32 %v2308, %v2309
      %v2311 = vrot.slane %v2310, 2
      %v2312 = vadd.f32 %v2310, %v2311
      %v2313 = vrot.slane %v2312, 1
      %v2314 = vadd.f32 %v2312, %v2313
      %v2315 = vrcp.pop %v2314
      %v2316 = vmul.f32 %v2303, %v2315
      %v2317 = vmul.f32 %v2305, %v2315
      %2318 = vst.msk [vmem:[%s573] sm:$0xff] %vm2290, %v2316
      %2319 = vst.msk [vmem:[%s573 + $0x8] sm:$0xff] %vm2290, %v2317
      %p2320 = scmp.lt.s32.totalorder %s29, 1
      %s2321 = scalar_select %p2320, %s29, 1
      %s2322 = smul.addr %s2321, 8
      %s2323 = smul.addr %s2322, 8
      %s2324 = scalar_lea.vmem %s15, %s2323
      %p2325 = scmp.lt.s32.totalorder %s29, 1
      %s2326 = scalar_select %p2325, %s29, 1
      %s2327 = smul.addr %s2326, 4
      %s2328 = smul.addr %s2327, 8
      %s2329 = scalar_lea.vmem %s16, %s2328
      %p2330 = scmp.lt.s32.totalorder %s29, 1
      %s2331 = scalar_select %p2330, %s29, 1
      %s2332 = smul.addr %s2331, 2
      %s2333 = smul.addr %s2332, 8
      %s2334 = scalar_lea.vmem %s17, %s2333
      // Predicated region
      $region81: #{sup_head_forward.1} parent=79 // pred_check
        %p2335 = pneg %p367
      $region82: #{sup_head_forward.1} parent=79 // pred_check_branch
        %2337 = sbr.rel (%p2335) target = $region84
      $region83: #{sup_head_forward.1} parent=79 // pred_region
        _
      $region84: #{sup_head_forward.1} parent=79 // pred_fallthru
        _
      // Predicated region
      $region85: #{sup_head_forward.1} parent=79 // pred_check
        %p2338 = pneg %p393
      $region86: #{sup_head_forward.1} parent=79 // pred_check_branch
        %2340 = sbr.rel (%p2338) target = $region88
      $region87: #{sup_head_forward.1} parent=79 // pred_region
        _
      $region88: #{sup_head_forward.1} parent=79 // pred_fallthru
        _
      // Predicated region
      $region89: #{sup_head_forward.1} parent=79 // pred_check
        %p2341 = pneg %p419
      $region90: #{sup_head_forward.1} parent=79 // pred_check_branch
        %2343 = sbr.rel (%p2341) target = $region92
      $region91: #{sup_head_forward.1} parent=79 // pred_region
        _
      $region92: #{sup_head_forward.1} parent=79 // pred_fallthru
        _
    $region80: #{sup_head_forward.1} parent=5 // pred_fallthru
      _
    %p2344 = scmp.le.s32.totalorder 2, %s24
    // Predicated region
    $region93: #{sup_head_forward.1} parent=5 // pred_check
      %p2345 = pneg %p2344
    $region94: #{sup_head_forward.1} parent=5 // pred_check_branch
      %2347 = sbr.rel (%p2345) target = $region96
    $region95: #{sup_head_forward.1} parent=5 // pred_region
      %s2348 = ssub.s32 %s24, 2
      // Predicated region
      $region97: #{sup_head_forward.1} parent=95 // pred_check
        %p2349 = pneg %p373
      $region98: #{sup_head_forward.1} parent=95 // pred_check_branch
        %2351 = sbr.rel (%p2349) target = $region100
      $region99: #{sup_head_forward.1} parent=95 // pred_region
        %p2352 = scmp.lt.s32.totalorder %s30, 1
        %s2353 = scalar_select %p2352, %s30, 1
        %s2354 = smul.addr %s2353, 8
        %s2355 = smul.addr %s2354, 8
        %s2356 = scalar_lea.vmem %s15, %s2355
      $region100: #{sup_head_forward.1} parent=95 // pred_fallthru
        _
      // Predicated region
      $region101: #{sup_head_forward.1} parent=95 // pred_check
        %p2357 = pneg %p399
      $region102: #{sup_head_forward.1} parent=95 // pred_check_branch
        %2359 = sbr.rel (%p2357) target = $region104
      $region103: #{sup_head_forward.1} parent=95 // pred_region
        %p2360 = scmp.lt.s32.totalorder %s30, 1
        %s2361 = scalar_select %p2360, %s30, 1
        %s2362 = smul.addr %s2361, 4
        %s2363 = smul.addr %s2362, 8
        %s2364 = scalar_lea.vmem %s16, %s2363
      $region104: #{sup_head_forward.1} parent=95 // pred_fallthru
        _
      // Predicated region
      $region105: #{sup_head_forward.1} parent=95 // pred_check
        %p2365 = pneg %p425
      $region106: #{sup_head_forward.1} parent=95 // pred_check_branch
        %2367 = sbr.rel (%p2365) target = $region108
      $region107: #{sup_head_forward.1} parent=95 // pred_region
        %p2368 = scmp.lt.s32.totalorder %s30, 1
        %s2369 = scalar_select %p2368, %s30, 1
        %s2370 = smul.addr %s2369, 2
        %s2371 = smul.addr %s2370, 8
        %s2372 = scalar_lea.vmem %s17, %s2371
      $region108: #{sup_head_forward.1} parent=95 // pred_fallthru
        _
    $region96: #{sup_head_forward.1} parent=5 // pred_fallthru
      _
  $region6: #{sup_head_forward.1} parent=0 // loop_footer
    %s28 = sadd.s32 1, %s24
  $region7: #{sup_head_forward.1} parent=0 // loop_footer_branch
    %23 = sbr.rel target = $region3
  $region8: #{sup_head_forward.1} parent=0 // loop_exit
    _

</llo_original>
